<compile_context>
chip_gen: v7x
topology: tpu7x:2x2x1
jax: 0.10.0
libtpu: 0.0.40
codegen_flags: <defaults>
</compile_context>

<pallas_src>
import functools

import jax
import jax.numpy as jnp
from jax import lax
from jax.experimental import pallas as pl
from jax.experimental.pallas import tpu as pltpu

EPS = 1e-5  # PyG LayerNorm default eps


def _round_up(a: int, m: int) -> int:
    return (a + m - 1) // m * m


# ----------------------------- pass 1 ---------------------------------------
def _gcn_relu_kernel(a_ref, x_ref, w_ref, b_ref, h_ref, sum_ref, ssq_ref,
                     *, tm: int, n_real: int, n_pad: int):
    # (A_hat_tile @ X) @ W : contract over N first with the narrow operand.
    ax = jnp.dot(a_ref[...], x_ref[...], preferred_element_type=jnp.float32)
    h = jnp.dot(ax, w_ref[...], preferred_element_type=jnp.float32) + b_ref[...]
    h = jnp.maximum(h, 0.0)  # ReLU

    if n_pad != n_real:
        # Zero padded node rows (they otherwise hold ReLU(b)) so the graph-wide
        # statistics below are exact with no host-side correction.
        row_ids = pl.program_id(0) * tm + lax.broadcasted_iota(
            jnp.int32, (tm, 1), 0)
        h = jnp.where(row_ids < n_real, h, 0.0)

    h_ref[...] = h
    # One-pass per-tile partial stats for graph-mode LayerNorm (reduced to a
    # scalar mean/var by a tiny JAX finalize step between the two passes).
    cs = jnp.sum(h, axis=0, keepdims=True)
    ssq = jnp.sum(h * h, axis=0, keepdims=True)
    sum_ref[...] = cs[None]
    ssq_ref[...] = ssq[None]


# ----------------------------- pass 2 ---------------------------------------
def _norm_apply_kernel(h_ref, scale_ref, shift_ref, o_ref):
    # LayerNorm folded into a single fused multiply-add per element.
    o_ref[...] = (h_ref[...] * scale_ref[...] + shift_ref[...]).astype(o_ref.dtype)


def gnn_block(x, edge_index, edge_weight, w, b, gamma, beta, *, tm=128):
    """x: (N, F_in) f32; edge_index: (2, E) int32; edge_weight: (E,) f32."""
    n, f_in = x.shape
    f_out = w.shape[1]
    f_pad = _round_up(f_out, 128)         # lane-dense feature dim
    n_pad = _round_up(n, tm)              # row-tiled node dim
    num_tiles = n_pad // tm

    # --- glue: dense normalized adjacency A_hat (exactly PyG gcn_norm) ------
    # Built in f32, cast to bf16 only at the end (precision of D^{-1/2}).
    src, dst = edge_index[0], edge_index[1]
    loop = jnp.arange(n, dtype=src.dtype)
    src = jnp.concatenate([src, loop])                             # self loops
    dst = jnp.concatenate([dst, loop])
    ew = jnp.concatenate([edge_weight.astype(jnp.float32),
                          jnp.ones((n,), jnp.float32)])
    deg = jnp.zeros((n,), jnp.float32).at[dst].add(ew)             # target degree
    dinv = jnp.where(deg > 0, jax.lax.rsqrt(deg), 0.0)
    norm = dinv[src] * ew * dinv[dst]
    a_hat = jnp.zeros((n_pad, n_pad), jnp.float32).at[dst, src].add(norm)
    a_hat = a_hat.astype(jnp.bfloat16)                             # row=target, col=source
    # TODO(synk): for very large graphs, replace the dense O(N^2) A_hat with a
    # CSR gather formulation via PrefetchScalarGridSpec (O(E*F) traffic).

    # Padded inputs / parameters (zeros in padding).
    x_p = jnp.zeros((n_pad, f_in), jnp.float32).at[:n].set(x).astype(jnp.bfloat16)
    w_p = jnp.zeros((f_in, f_pad), jnp.float32).at[:, :f_out].set(w)
    b_p = jnp.zeros((1, f_pad), jnp.float32).at[0, :f_out].set(b)
    gamma_p = jnp.zeros((1, f_pad), jnp.float32).at[0, :f_out].set(gamma)
    beta_p = jnp.zeros((1, f_pad), jnp.float32).at[0, :f_out].set(beta)

    # VMEM budget for pass 1 (double-buffered tiles) with headroom, v7x-safe.
    bytes_need = (2 * tm * n_pad * 2        # A_hat row tiles (bf16, x2 bufs)
                  + 2 * n_pad * f_in * 2    # X (bf16)
                  + 2 * f_in * f_pad * 4    # W
                  + 2 * f_pad * 4           # b
                  + 2 * tm * f_pad * 4      # h output tiles
                  + 4 * f_pad * 4)          # partial-stat outputs
    vmem_limit = int(min(max(2 * bytes_need, 8 << 20), 48 << 20))

    # ---------------- pass 1: tiled GCNConv + ReLU + partial stats ----------
    kern1 = functools.partial(_gcn_relu_kernel, tm=tm, n_real=n, n_pad=n_pad)
    h, psum, pssq = pl.pallas_call(
        kern1,
        grid=(num_tiles,),
        in_specs=[
            pl.BlockSpec((tm, n_pad), lambda i: (i, 0)),       # A_hat row tile
            pl.BlockSpec((n_pad, f_in), lambda i: (0, 0)),     # X (resident)
            pl.BlockSpec((f_in, f_pad), lambda i: (0, 0)),     # W (resident)
            pl.BlockSpec((1, f_pad), lambda i: (0, 0)),        # b
        ],
        out_specs=[
            pl.BlockSpec((tm, f_pad), lambda i: (i, 0)),       # h tile
            pl.BlockSpec((1, 1, f_pad), lambda i: (i, 0, 0)),  # partial sum
            pl.BlockSpec((1, 1, f_pad), lambda i: (i, 0, 0)),  # partial sumsq
        ],
        out_shape=[
            jax.ShapeDtypeStruct((n_pad, f_pad), jnp.float32),
            jax.ShapeDtypeStruct((num_tiles, 1, f_pad), jnp.float32),
            jax.ShapeDtypeStruct((num_tiles, 1, f_pad), jnp.float32),
        ],
        compiler_params=pltpu.CompilerParams(
            dimension_semantics=("parallel",),
            vmem_limit_bytes=vmem_limit),
    )(a_hat, x_p, w_p, b_p)

    # ---------------- finalize graph-wide stats (tiny, plain JAX) -----------
    n_elem = jnp.float32(n * f_out)
    mean = jnp.sum(psum) / n_elem
    var = jnp.maximum(jnp.sum(pssq) / n_elem - mean * mean, 0.0)  # unbiased=False
    std = jnp.sqrt(var)
    scale = gamma_p / (std + EPS)          # zero on padded feature columns
    shift = beta_p - mean * scale          # zero on padded feature columns

    # ---------------- pass 2: tiled scale/shift (LayerNorm apply) -----------
    out_p = pl.pallas_call(
        _norm_apply_kernel,
        grid=(num_tiles,),
        in_specs=[
            pl.BlockSpec((tm, f_pad), lambda i: (i, 0)),
            pl.BlockSpec((1, f_pad), lambda i: (0, 0)),
            pl.BlockSpec((1, f_pad), lambda i: (0, 0)),
        ],
        out_specs=pl.BlockSpec((tm, f_pad), lambda i: (i, 0)),
        out_shape=jax.ShapeDtypeStruct((n_pad, f_pad), x.dtype),
        compiler_params=pltpu.CompilerParams(
            dimension_semantics=("parallel",)),
    )(h, scale, shift)

    return out_p[:n, :f_out]


def gnn_block_ref(x, edge_index, edge_weight, w, b, gamma, beta):
    """Pure-JAX f32 reference with the original PyG math (validation)."""
    n = x.shape[0]
    src, dst = edge_index[0], edge_index[1]
    loop = jnp.arange(n, dtype=src.dtype)
    src = jnp.concatenate([src, loop])
    dst = jnp.concatenate([dst, loop])
    ew = jnp.concatenate([edge_weight, jnp.ones((n,), edge_weight.dtype)])
    deg = jnp.zeros((n,), jnp.float32).at[dst].add(ew)
    dinv = jnp.where(deg > 0, jax.lax.rsqrt(deg), 0.0)
    norm = dinv[src] * ew * dinv[dst]
    a_hat = jnp.zeros((n, n), jnp.float32).at[dst, src].add(norm)
    h = a_hat @ (x @ w) + b
    h = jnp.maximum(h, 0.0)
    mean = h.mean()
    std = jnp.sqrt(((h - mean) ** 2).mean())
    return (h - mean) / (std + EPS) * gamma + beta


if __name__ == "__main__":
    key = jax.random.PRNGKey(0)
    N, E = 300, 600           # nodes, edges (multi-tile grid + padding path)
    F_IN, F_OUT = 16, 32      # input_size, output_size

    k_x, k_ei, k_ew, k_w, k_b, k_g, k_be = jax.random.split(key, 7)
    x = jax.random.normal(k_x, (N, F_IN), dtype=jnp.float32)
    edge_index = jax.random.randint(k_ei, (2, E), 0, N, dtype=jnp.int32)
    edge_weight = jax.random.uniform(k_ew, (E,), dtype=jnp.float32,
                                     minval=0.1, maxval=1.0)

    glorot = jnp.sqrt(6.0 / (F_IN + F_OUT))
    w = jax.random.uniform(k_w, (F_IN, F_OUT), dtype=jnp.float32,
                           minval=-glorot, maxval=glorot)
    b = 0.1 * jax.random.normal(k_b, (F_OUT,), dtype=jnp.float32)
    gamma = 1.0 + 0.1 * jax.random.normal(k_g, (F_OUT,), dtype=jnp.float32)
    beta = 0.05 * jax.random.normal(k_be, (F_OUT,), dtype=jnp.float32)

    run = jax.jit(gnn_block)
    out = run(x, edge_index, edge_weight, w, b, gamma, beta)
    out = jax.block_until_ready(out)

    ref = gnn_block_ref(x, edge_index, edge_weight, w, b, gamma, beta)
    assert out.shape == (N, F_OUT)
    # bf16 adjacency/features on the MXU path => loose tolerance vs f32 ref.
    assert jnp.allclose(out, ref, atol=5e-2, rtol=5e-2), "mismatch vs JAX reference"

    print("KERNEL_OK")
</pallas_src>

<mosaic_0001>
module attributes {stable_mosaic.version = 11 : i64} {
  func.func @_gcn_relu_kernel(%arg0: i32, %arg1: memref<128x384xbf16, #tpu.memory_space<vmem>>, %arg2: memref<384x16xbf16, #tpu.memory_space<vmem>>, %arg3: memref<16x128xf32, #tpu.memory_space<vmem>>, %arg4: memref<1x128xf32, #tpu.memory_space<vmem>>, %arg5: memref<128x128xf32, #tpu.memory_space<vmem>>, %arg6: memref<1x1x128xf32, #tpu.memory_space<vmem>>, %arg7: memref<1x1x128xf32, #tpu.memory_space<vmem>>) attributes {dimension_semantics = [#tpu.dimension_semantics<parallel>], iteration_bounds = array<i64: 3>, scalar_prefetch = 0 : i64, scratch_operands = 0 : i64, tpu.core_type = #tpu.core_type<tc>, window_params = [{transform_indices = @transform_0, window_bounds = array<i64: 128, 384>}, {pipeline_mode = #tpu.pipeline_mode<synchronous>, transform_indices = @transform_1, window_bounds = array<i64: 384, 16>}, {pipeline_mode = #tpu.pipeline_mode<synchronous>, transform_indices = @transform_2, window_bounds = array<i64: 16, 128>}, {pipeline_mode = #tpu.pipeline_mode<synchronous>, transform_indices = @transform_3, window_bounds = array<i64: 1, 128>}, {transform_indices = @transform_4, window_bounds = array<i64: 128, 128>}, {transform_indices = @transform_5, window_bounds = array<i64: 1, 1, 128>}, {transform_indices = @transform_6, window_bounds = array<i64: 1, 1, 128>}]} {
    %c0 = arith.constant 0 : index
    %c0_0 = arith.constant 0 : index
    %0 = vector.load %arg1[%c0, %c0_0] : memref<128x384xbf16, #tpu.memory_space<vmem>>, vector<128x384xbf16>
    %c0_1 = arith.constant 0 : index
    %c0_2 = arith.constant 0 : index
    %1 = vector.load %arg2[%c0_1, %c0_2] : memref<384x16xbf16, #tpu.memory_space<vmem>>, vector<384x16xbf16>
    %cst = arith.constant dense<0.000000e+00> : vector<128x16xf32>
    %2 = tpu.matmul %0, %1, %cst {dimension_numbers = #tpu.dot_dimension_numbers<[1], [0], [0], [1], [0, 0, 1, 1], [], []>} : vector<128x384xbf16>, vector<384x16xbf16>, vector<128x16xf32> -> vector<128x16xf32>
    %c0_3 = arith.constant 0 : index
    %c0_4 = arith.constant 0 : index
    %3 = vector.load %arg3[%c0_3, %c0_4] : memref<16x128xf32, #tpu.memory_space<vmem>>, vector<16x128xf32>
    %cst_5 = arith.constant dense<0.000000e+00> : vector<128x128xf32>
    %4 = tpu.matmul %2, %3, %cst_5 {dimension_numbers = #tpu.dot_dimension_numbers<[1], [0], [0], [1], [0, 0, 1, 1], [], []>} : vector<128x16xf32>, vector<16x128xf32>, vector<128x128xf32> -> vector<128x128xf32>
    %c0_6 = arith.constant 0 : index
    %c0_7 = arith.constant 0 : index
    %5 = vector.load %arg4[%c0_6, %c0_7] : memref<1x128xf32, #tpu.memory_space<vmem>>, vector<1x128xf32>
    %6 = vector.broadcast %5 : vector<1x128xf32> to vector<128x128xf32>
    %7 = arith.addf %4, %6 : vector<128x128xf32>
    %cst_8 = arith.constant 0.000000e+00 : f32
    %8 = vector.broadcast %cst_8 : f32 to vector<128x128xf32>
    %9 = arith.maximumf %7, %8 : vector<128x128xf32>
    %c128_i32 = arith.constant 128 : i32
    %10 = arith.muli %arg0, %c128_i32 : i32
    %11 = tpu.iota {dimensions = array<i32: 0>} : vector<128x1xi32>
    %12 = vector.broadcast %10 : i32 to vector<128x1xi32>
    %13 = arith.addi %12, %11 : vector<128x1xi32>
    %c300_i32 = arith.constant 300 : i32
    %14 = vector.broadcast %c300_i32 : i32 to vector<128x1xi32>
    %15 = arith.cmpi slt, %13, %14 : vector<128x1xi32>
    %cst_9 = arith.constant 0.000000e+00 : f32
    %16 = vector.shape_cast %15 : vector<128x1xi1> to vector<128x1xi1>
    %17 = vector.broadcast %16 : vector<128x1xi1> to vector<128x128xi1>
    %18 = vector.broadcast %cst_9 : f32 to vector<128x128xf32>
    %19 = arith.select %17, %9, %18 : vector<128x128xi1>, vector<128x128xf32>
    %c0_10 = arith.constant 0 : index
    %c0_11 = arith.constant 0 : index
    %20 = vector.load %arg5[%c0_10, %c0_11] : memref<128x128xf32, #tpu.memory_space<vmem>>, vector<128x128xf32>
    tpu.vector_store %arg5[%c0_10, %c0_11], %19 {strides = array<i32>} : memref<128x128xf32, #tpu.memory_space<vmem>>, vector<128x128xf32>,
    %cst_12 = arith.constant dense<0.000000e+00> : vector<128xf32>
    %21 = vector.multi_reduction <add>, %19, %cst_12 [0] : vector<128x128xf32> to vector<128xf32>
    %22 = vector.shape_cast %21 : vector<128xf32> to vector<1x128xf32>
    %23 = arith.mulf %19, %19 : vector<128x128xf32>
    %cst_13 = arith.constant dense<0.000000e+00> : vector<128xf32>
    %24 = vector.multi_reduction <add>, %23, %cst_13 [0] : vector<128x128xf32> to vector<128xf32>
    %25 = vector.shape_cast %24 : vector<128xf32> to vector<1x128xf32>
    %26 = vector.shape_cast %22 : vector<1x128xf32> to vector<1x1x128xf32>
    %c0_14 = arith.constant 0 : index
    %c0_15 = arith.constant 0 : index
    %c0_16 = arith.constant 0 : index
    %27 = vector.load %arg6[%c0_14, %c0_15, %c0_16] : memref<1x1x128xf32, #tpu.memory_space<vmem>>, vector<1x1x128xf32>
    tpu.vector_store %arg6[%c0_14, %c0_15, %c0_16], %26 {strides = array<i32>} : memref<1x1x128xf32, #tpu.memory_space<vmem>>, vector<1x1x128xf32>,
    %28 = vector.shape_cast %25 : vector<1x128xf32> to vector<1x1x128xf32>
    %c0_17 = arith.constant 0 : index
    %c0_18 = arith.constant 0 : index
    %c0_19 = arith.constant 0 : index
    %29 = vector.load %arg7[%c0_17, %c0_18, %c0_19] : memref<1x1x128xf32, #tpu.memory_space<vmem>>, vector<1x1x128xf32>
    tpu.vector_store %arg7[%c0_17, %c0_18, %c0_19], %28 {strides = array<i32>} : memref<1x1x128xf32, #tpu.memory_space<vmem>>, vector<1x1x128xf32>,
    return
  }
  func.func @transform_0(%arg0: i32) -> (i32, i32) {
    %c0_i32 = arith.constant 0 : i32
    %c0_i32_0 = arith.constant 0 : i32
    return %arg0, %c0_i32 : i32, i32
  }
  func.func @transform_1(%arg0: i32) -> (i32, i32) {
    %c0_i32 = arith.constant 0 : i32
    %c0_i32_0 = arith.constant 0 : i32
    %c0_i32_1 = arith.constant 0 : i32
    return %c0_i32, %c0_i32_0 : i32, i32
  }
  func.func @transform_2(%arg0: i32) -> (i32, i32) {
    %c0_i32 = arith.constant 0 : i32
    %c0_i32_0 = arith.constant 0 : i32
    %c0_i32_1 = arith.constant 0 : i32
    return %c0_i32, %c0_i32_0 : i32, i32
  }
  func.func @transform_3(%arg0: i32) -> (i32, i32) {
    %c0_i32 = arith.constant 0 : i32
    %c0_i32_0 = arith.constant 0 : i32
    %c0_i32_1 = arith.constant 0 : i32
    return %c0_i32, %c0_i32_0 : i32, i32
  }
  func.func @transform_4(%arg0: i32) -> (i32, i32) {
    %c0_i32 = arith.constant 0 : i32
    %c0_i32_0 = arith.constant 0 : i32
    return %arg0, %c0_i32 : i32, i32
  }
  func.func @transform_5(%arg0: i32) -> (i32, i32, i32) {
    %c0_i32 = arith.constant 0 : i32
    %c0_i32_0 = arith.constant 0 : i32
    %c0_i32_1 = arith.constant 0 : i32
    return %arg0, %c0_i32, %c0_i32_0 : i32, i32, i32
  }
  func.func @transform_6(%arg0: i32) -> (i32, i32, i32) {
    %c0_i32 = arith.constant 0 : i32
    %c0_i32_0 = arith.constant 0 : i32
    %c0_i32_1 = arith.constant 0 : i32
    return %arg0, %c0_i32, %c0_i32_0 : i32, i32, i32
  }
}

module attributes {stable_mosaic.version = 11 : i64} {
  func.func @_norm_apply_kernel(%arg0: i32, %arg1: memref<128x128xf32, #tpu.memory_space<vmem>>, %arg2: memref<1x128xf32, #tpu.memory_space<vmem>>, %arg3: memref<1x128xf32, #tpu.memory_space<vmem>>, %arg4: memref<128x128xf32, #tpu.memory_space<vmem>>) attributes {dimension_semantics = [#tpu.dimension_semantics<parallel>], iteration_bounds = array<i64: 3>, scalar_prefetch = 0 : i64, scratch_operands = 0 : i64, tpu.core_type = #tpu.core_type<tc>, window_params = [{transform_indices = @transform_0, window_bounds = array<i64: 128, 128>}, {pipeline_mode = #tpu.pipeline_mode<synchronous>, transform_indices = @transform_1, window_bounds = array<i64: 1, 128>}, {pipeline_mode = #tpu.pipeline_mode<synchronous>, transform_indices = @transform_2, window_bounds = array<i64: 1, 128>}, {transform_indices = @transform_3, window_bounds = array<i64: 128, 128>}]} {
    %c0 = arith.constant 0 : index
    %c0_0 = arith.constant 0 : index
    %0 = vector.load %arg1[%c0, %c0_0] : memref<128x128xf32, #tpu.memory_space<vmem>>, vector<128x128xf32>
    %c0_1 = arith.constant 0 : index
    %c0_2 = arith.constant 0 : index
    %1 = vector.load %arg2[%c0_1, %c0_2] : memref<1x128xf32, #tpu.memory_space<vmem>>, vector<1x128xf32>
    %2 = vector.broadcast %1 : vector<1x128xf32> to vector<128x128xf32>
    %3 = arith.mulf %0, %2 : vector<128x128xf32>
    %c0_3 = arith.constant 0 : index
    %c0_4 = arith.constant 0 : index
    %4 = vector.load %arg3[%c0_3, %c0_4] : memref<1x128xf32, #tpu.memory_space<vmem>>, vector<1x128xf32>
    %5 = vector.broadcast %4 : vector<1x128xf32> to vector<128x128xf32>
    %6 = arith.addf %3, %5 : vector<128x128xf32>
    %c0_5 = arith.constant 0 : index
    %c0_6 = arith.constant 0 : index
    %7 = vector.load %arg4[%c0_5, %c0_6] : memref<128x128xf32, #tpu.memory_space<vmem>>, vector<128x128xf32>
    tpu.vector_store %arg4[%c0_5, %c0_6], %6 {strides = array<i32>} : memref<128x128xf32, #tpu.memory_space<vmem>>, vector<128x128xf32>,
    return
  }
  func.func @transform_0(%arg0: i32) -> (i32, i32) {
    %c0_i32 = arith.constant 0 : i32
    %c0_i32_0 = arith.constant 0 : i32
    return %arg0, %c0_i32 : i32, i32
  }
  func.func @transform_1(%arg0: i32) -> (i32, i32) {
    %c0_i32 = arith.constant 0 : i32
    %c0_i32_0 = arith.constant 0 : i32
    %c0_i32_1 = arith.constant 0 : i32
    return %c0_i32, %c0_i32_0 : i32, i32
  }
  func.func @transform_2(%arg0: i32) -> (i32, i32) {
    %c0_i32 = arith.constant 0 : i32
    %c0_i32_0 = arith.constant 0 : i32
    %c0_i32_1 = arith.constant 0 : i32
    return %c0_i32, %c0_i32_0 : i32, i32
  }
  func.func @transform_3(%arg0: i32) -> (i32, i32) {
    %c0_i32 = arith.constant 0 : i32
    %c0_i32_0 = arith.constant 0 : i32
    return %arg0, %c0_i32 : i32, i32
  }
}

</mosaic_0001>

<llo_original>
// kernel: gnn_block.3
$region0: #{gnn_block.3}
  #allocation0 [shape = 'u32[]', space=smem, size = 0x4, offset = 0x4, fixed_abs, tag = 'smem constant byte address 0x4 - core index']
  #allocation1 [shape = 'u32[144,128]{1,0:T(1,128)}', space=vmem, size = 0x12000, scoped, tag = 'internal scratch']
  %s0 = inlined_call_operand.vmem [shape: f32[384,128], index: 0, kind: input, shape index: {}]
  %s1 = inlined_call_operand.vmem [shape: f32[1,128], index: 1, kind: input, shape index: {}]
  %s2 = inlined_call_operand.vmem [shape: f32[1,128], index: 2, kind: input, shape index: {}]
  %s3 = inlined_call_operand.vmem [shape: f32[384,128], index: 3, kind: output, shape index: {}]
  %s4 = sld [smem:[#allocation0]]
  $region45: #{gnn_block.3} parent=0
    _
  %s6 = ssub.s32 1, %s4
  %s7 = scalar_select 0, %s6, %s4
  loop: start=0, step=1, limit=5
  $region2: #{gnn_block.3} parent=0 // loop_pre_header
    _
  $region3: #{gnn_block.3} parent=0 // loop_header
    %s9 = sphi 0, %s13
    %p10 = scmp.ge.s32.totalorder %s9, 5
    %s19 = sphi 0, %s21
    %s22 = sphi 0, %s19
    %s23 = sphi 0, %s22
    %s39 = sphi 0, %s23
    %s43 = sphi 0, %s43
    %s45 = sphi 0, %s43
    %s46 = sphi 0, %s45
    %s60 = sphi 0, %s46
    %s64 = sphi 0, %s64
    %s66 = sphi 0, %s64
    %s67 = sphi 0, %s66
    %s81 = sphi 0, %s67
    %s87 = sphi 0, %s89
    %s90 = sphi 0, %s87
    %s91 = sphi 0, %s90
    %s107 = sphi 0, %s91
  $region4: #{gnn_block.3} parent=0 // loop_header_branch
    %12 = sbr.rel (%p10) target = $region8
  $region5: #{gnn_block.3} parent=0 // loop_body
    %s14 = ssub.s32 %s9, 1
    %s15 = ssub.s32 %s9, 2
    %s16 = sadd.s32 %s9, 1
    %s17 = ssub.s32 %s9, %s16
    %p18 = scmp.eq.s32.totalorder %s17, 0
    %s20 = sadd.s32 %s19, 1
    %s21 = scalar_select %p18, %s19, %s20
    %p24 = pneg %p18
    %p25 = scmp.eq.s32.totalorder %s9, 2
    %p26 = por %p24, %p25
    %p27 = scmp.ne.s32.totalorder %s19, %s22
    %p28 = scmp.eq.s32.totalorder %s9, 0
    %p29 = por %p27, %p28
    %p30 = scmp.ne.s32.totalorder %s19, %s22
    %p31 = scmp.eq.s32.totalorder %s14, 2
    %p32 = por %p30, %p31
    %p33 = scmp.ne.s32.totalorder %s22, %s23
    %p34 = scmp.eq.s32.totalorder %s14, 0
    %p35 = por %p33, %p34
    %p36 = scmp.ne.s32.totalorder %s22, %s23
    %p37 = scmp.eq.s32.totalorder %s15, 2
    %p38 = por %p36, %p37
    %p40 = scmp.ne.s32.totalorder %s23, %s39
    %p41 = scmp.eq.s32.totalorder %s15, 0
    %p42 = por %p40, %p41
    %s44 = sadd.s32 %s43, 1
    %p47 = scmp.eq.s32.totalorder %s9, 2
    %p48 = scmp.ne.s32.totalorder %s43, %s45
    %p49 = scmp.eq.s32.totalorder %s9, 0
    %p50 = por %p48, %p49
    %p51 = scmp.ne.s32.totalorder %s43, %s45
    %p52 = scmp.eq.s32.totalorder %s14, 2
    %p53 = por %p51, %p52
    %p54 = scmp.ne.s32.totalorder %s45, %s46
    %p55 = scmp.eq.s32.totalorder %s14, 0
    %p56 = por %p54, %p55
    %p57 = scmp.ne.s32.totalorder %s45, %s46
    %p58 = scmp.eq.s32.totalorder %s15, 2
    %p59 = por %p57, %p58
    %p61 = scmp.ne.s32.totalorder %s46, %s60
    %p62 = scmp.eq.s32.totalorder %s15, 0
    %p63 = por %p61, %p62
    %s65 = sadd.s32 %s64, 1
    %p68 = scmp.eq.s32.totalorder %s9, 2
    %p69 = scmp.ne.s32.totalorder %s64, %s66
    %p70 = scmp.eq.s32.totalorder %s9, 0
    %p71 = por %p69, %p70
    %p72 = scmp.ne.s32.totalorder %s64, %s66
    %p73 = scmp.eq.s32.totalorder %s14, 2
    %p74 = por %p72, %p73
    %p75 = scmp.ne.s32.totalorder %s66, %s67
    %p76 = scmp.eq.s32.totalorder %s14, 0
    %p77 = por %p75, %p76
    %p78 = scmp.ne.s32.totalorder %s66, %s67
    %p79 = scmp.eq.s32.totalorder %s15, 2
    %p80 = por %p78, %p79
    %p82 = scmp.ne.s32.totalorder %s67, %s81
    %p83 = scmp.eq.s32.totalorder %s15, 0
    %p84 = por %p82, %p83
    %s85 = ssub.s32 %s9, %s16
    %p86 = scmp.eq.s32.totalorder %s85, 0
    %s88 = sadd.s32 %s87, 1
    %s89 = scalar_select %p86, %s87, %s88
    %p92 = pneg %p86
    %p93 = scmp.eq.s32.totalorder %s9, 2
    %p94 = por %p92, %p93
    %p95 = scmp.ne.s32.totalorder %s87, %s90
    %p96 = scmp.eq.s32.totalorder %s9, 0
    %p97 = por %p95, %p96
    %p98 = scmp.ne.s32.totalorder %s87, %s90
    %p99 = scmp.eq.s32.totalorder %s14, 2
    %p100 = por %p98, %p99
    %p101 = scmp.ne.s32.totalorder %s90, %s91
    %p102 = scmp.eq.s32.totalorder %s14, 0
    %p103 = por %p101, %p102
    %p104 = scmp.ne.s32.totalorder %s90, %s91
    %p105 = scmp.eq.s32.totalorder %s15, 2
    %p106 = por %p104, %p105
    %p108 = scmp.ne.s32.totalorder %s91, %s107
    %p109 = scmp.eq.s32.totalorder %s15, 0
    %p110 = por %p108, %p109
    %p111 = scmp.le.s32.totalorder 1, %s9
    %p112 = scmp.lt.s32.totalorder %s9, 4
    %p113 = pnand %p111, %p112
    %p114 = pneg %p113
    // Predicated region
    $region9: #{gnn_block.3} parent=5 // pred_check
      _
    $region10: #{gnn_block.3} parent=5 // pred_check_branch
      %116 = sbr.rel (%p113) target = $region12
    $region11: #{gnn_block.3} parent=5 // pred_region
      %s117 = ssub.s32 %s9, 1
      // Predicated region
      $region13: #{gnn_block.3} parent=11 // pred_check
        %p118 = pneg %p56
      $region14: #{gnn_block.3} parent=11 // pred_check_branch
        %120 = sbr.rel (%p118) target = $region16
      $region15: #{gnn_block.3} parent=11 // pred_region
        _
      $region16: #{gnn_block.3} parent=11 // pred_fallthru
        _
      // Predicated region
      $region17: #{gnn_block.3} parent=11 // pred_check
        %p121 = pneg %p77
      $region18: #{gnn_block.3} parent=11 // pred_check_branch
        %123 = sbr.rel (%p121) target = $region20
      $region19: #{gnn_block.3} parent=11 // pred_region
        _
      $region20: #{gnn_block.3} parent=11 // pred_fallthru
        _
    $region12: #{gnn_block.3} parent=5 // pred_fallthru
      _
    %p124 = scmp.lt.s32.totalorder %s9, 3
    // Predicated region
    $region21: #{gnn_block.3} parent=5 // pred_check
      %p125 = pneg %p124
    $region22: #{gnn_block.3} parent=5 // pred_check_branch
      %127 = sbr.rel (%p125) target = $region24
    $region23: #{gnn_block.3} parent=5 // pred_region
      // Predicated region
      $region25: #{gnn_block.3} parent=23 // pred_check
        %p128 = pneg %p29
      $region26: #{gnn_block.3} parent=23 // pred_check_branch
        %130 = sbr.rel (%p128) target = $region28
      $region27: #{gnn_block.3} parent=23 // pred_region
        %s131 = smul.u32 16, %s9
        %p132 = scmp.lt.s32.totalorder %s131, 47
        %s133 = scalar_select %p132, %s131, 47
        %s134 = smul.addr %s133, 8
        %s135 = scalar_lea.vmem %s0, %s134
        %s136 = smul.u32 16, %s9
      $region28: #{gnn_block.3} parent=23 // pred_fallthru
        _
    $region24: #{gnn_block.3} parent=5 // pred_fallthru
      _
    %p137 = scmp.le.s32.totalorder 1, %s9
    %p138 = scmp.lt.s32.totalorder %s9, 4
    %p139 = pnand %p137, %p138
    %p140 = pneg %p139
    // Predicated region
    $region29: #{gnn_block.3} parent=5 // pred_check
      _
    $region30: #{gnn_block.3} parent=5 // pred_check_branch
      %142 = sbr.rel (%p139) target = $region32
    $region31: #{gnn_block.3} parent=5 // pred_region
      %s143 = ssub.s32 %s9, 1
      %s144 = smul.u32 16, %s14
      %p145 = scmp.lt.s32.totalorder %s144, 47
      %s146 = scalar_select %p145, %s144, 47
      %s147 = smul.addr %s146, 8
      %s148 = scalar_lea.vmem %s0, %s147
      %p149 = pneg %p35
      %p150 = pneg %p32
      %p151 = pneg %p56
      %p152 = pneg %p53
      %p153 = pneg %p77
      %p154 = pneg %p74
      %p155 = pneg %p103
      %p156 = pneg %p100
      %s157 = smul.u32 16, %s14
      %p158 = scmp.lt.s32.totalorder %s157, 47
      %s159 = scalar_select %p158, %s157, 47
      %s160 = smul.addr %s159, 8
      %s161 = scalar_lea.vmem %s3, %s160
      %s162 = smul.u32 16, %s14
      %p163 = scmp.lt.s32.totalorder %s162, 47
      %s164 = scalar_select %p163, %s162, 47
      %s165 = smul.addr %s164, 8
      %s166 = scalar_lea.vmem %s0, %s165
      %s167 = smul.u32 16, %s14
      %s168 = smul.u32 16, %s14
      %p169 = scmp.lt.s32.totalorder %s168, 47
      %s170 = scalar_select %p169, %s168, 47
      %s171 = smul.addr %s170, 8
      %s172 = scalar_lea.vmem %s3, %s171
      %s173 = smul.u32 16, %s14
      %v174 = vld [vmem:[%s166] sm:$0xff]
      %v175 = vld [vmem:[%s166 + $0x8] sm:$0xff]
      %v176 = vld [vmem:[%s166 + $0x10] sm:$0xff]
      %v177 = vld [vmem:[%s166 + $0x18] sm:$0xff]
      %v178 = vld [vmem:[%s166 + $0x20] sm:$0xff]
      %v179 = vld [vmem:[%s166 + $0x28] sm:$0xff]
      %v180 = vld [vmem:[%s166 + $0x30] sm:$0xff]
      %v181 = vld [vmem:[%s166 + $0x38] sm:$0xff]
      %v182 = vld [vmem:[%s166 + $0x40] sm:$0xff]
      %v183 = vld [vmem:[%s166 + $0x48] sm:$0xff]
      %v184 = vld [vmem:[%s166 + $0x50] sm:$0xff]
      %v185 = vld [vmem:[%s166 + $0x58] sm:$0xff]
      %v186 = vld [vmem:[%s166 + $0x60] sm:$0xff]
      %v187 = vld [vmem:[%s166 + $0x68] sm:$0xff]
      %v188 = vld [vmem:[%s166 + $0x70] sm:$0xff]
      %v189 = vld [vmem:[%s166 + $0x78] sm:$0xff]
      %v190 = vld [vmem:[%s1] sm:$0x1]
      %v192 = vlaneseq
      %v193 = vshrl.u32 %v192, 7
      %v194 = vsub.s32 0, %v193
      %v195 = vrot.slane %v190, %v194
      %v197 = vmul.f32 %v174, %v195
      %v198 = vmul.f32 %v175, %v195
      %v199 = vmul.f32 %v176, %v195
      %v200 = vmul.f32 %v177, %v195
      %v201 = vmul.f32 %v178, %v195
      %v202 = vmul.f32 %v179, %v195
      %v203 = vmul.f32 %v180, %v195
      %v204 = vmul.f32 %v181, %v195
      %v205 = vmul.f32 %v182, %v195
      %v206 = vmul.f32 %v183, %v195
      %v207 = vmul.f32 %v184, %v195
      %v208 = vmul.f32 %v185, %v195
      %v209 = vmul.f32 %v186, %v195
      %v210 = vmul.f32 %v187, %v195
      %v211 = vmul.f32 %v188, %v195
      %v212 = vmul.f32 %v189, %v195
      %v213 = vld [vmem:[%s2] sm:$0x1]
      %v215 = vlaneseq
      %v216 = vshrl.u32 %v215, 7
      %v217 = vsub.s32 0, %v216
      %v218 = vrot.slane %v213, %v217
      %v220 = vadd.f32 %v197, %v218
      %v221 = vadd.f32 %v198, %v218
      %v222 = vadd.f32 %v199, %v218
      %v223 = vadd.f32 %v200, %v218
      %v224 = vadd.f32 %v201, %v218
      %v225 = vadd.f32 %v202, %v218
      %v226 = vadd.f32 %v203, %v218
      %v227 = vadd.f32 %v204, %v218
      %v228 = vadd.f32 %v205, %v218
      %v229 = vadd.f32 %v206, %v218
      %v230 = vadd.f32 %v207, %v218
      %v231 = vadd.f32 %v208, %v218
      %v232 = vadd.f32 %v209, %v218
      %v233 = vadd.f32 %v210, %v218
      %v234 = vadd.f32 %v211, %v218
      %v235 = vadd.f32 %v212, %v218
      %236 = vst [vmem:[%s172] sm:$0xff] %v220
      %237 = vst [vmem:[%s172 + $0x8] sm:$0xff] %v221
      %238 = vst [vmem:[%s172 + $0x10] sm:$0xff] %v222
      %239 = vst [vmem:[%s172 + $0x18] sm:$0xff] %v223
      %240 = vst [vmem:[%s172 + $0x20] sm:$0xff] %v224
      %241 = vst [vmem:[%s172 + $0x28] sm:$0xff] %v225
      %242 = vst [vmem:[%s172 + $0x30] sm:$0xff] %v226
      %243 = vst [vmem:[%s172 + $0x38] sm:$0xff] %v227
      %244 = vst [vmem:[%s172 + $0x40] sm:$0xff] %v228
      %245 = vst [vmem:[%s172 + $0x48] sm:$0xff] %v229
      %246 = vst [vmem:[%s172 + $0x50] sm:$0xff] %v230
      %247 = vst [vmem:[%s172 + $0x58] sm:$0xff] %v231
      %248 = vst [vmem:[%s172 + $0x60] sm:$0xff] %v232
      %249 = vst [vmem:[%s172 + $0x68] sm:$0xff] %v233
      %250 = vst [vmem:[%s172 + $0x70] sm:$0xff] %v234
      %251 = vst [vmem:[%s172 + $0x78] sm:$0xff] %v235
      %s252 = smul.u32 16, %s14
      %p253 = scmp.lt.s32.totalorder %s252, 47
      %s254 = scalar_select %p253, %s252, 47
      %s255 = smul.addr %s254, 8
      %s256 = scalar_lea.vmem %s3, %s255
      // Predicated region
      $region33: #{gnn_block.3} parent=31 // pred_check
        %p257 = pneg %p100
      $region34: #{gnn_block.3} parent=31 // pred_check_branch
        %259 = sbr.rel (%p257) target = $region36
      $region35: #{gnn_block.3} parent=31 // pred_region
        %s260 = smul.u32 16, %s14
      $region36: #{gnn_block.3} parent=31 // pred_fallthru
        _
    $region32: #{gnn_block.3} parent=5 // pred_fallthru
      _
    %p261 = scmp.le.s32.totalorder 2, %s9
    // Predicated region
    $region37: #{gnn_block.3} parent=5 // pred_check
      %p262 = pneg %p261
    $region38: #{gnn_block.3} parent=5 // pred_check_branch
      %264 = sbr.rel (%p262) target = $region40
    $region39: #{gnn_block.3} parent=5 // pred_region
      %s265 = ssub.s32 %s9, 2
      // Predicated region
      $region41: #{gnn_block.3} parent=39 // pred_check
        %p266 = pneg %p106
      $region42: #{gnn_block.3} parent=39 // pred_check_branch
        %268 = sbr.rel (%p266) target = $region44
      $region43: #{gnn_block.3} parent=39 // pred_region
        %s269 = smul.u32 16, %s15
        %p270 = scmp.lt.s32.totalorder %s269, 47
        %s271 = scalar_select %p270, %s269, 47
        %s272 = smul.addr %s271, 8
        %s273 = scalar_lea.vmem %s3, %s272
      $region44: #{gnn_block.3} parent=39 // pred_fallthru
        _
    $region40: #{gnn_block.3} parent=5 // pred_fallthru
      _
  $region6: #{gnn_block.3} parent=0 // loop_footer
    %s13 = sadd.s32 1, %s9
  $region7: #{gnn_block.3} parent=0 // loop_footer_branch
    %8 = sbr.rel target = $region3
  $region8: #{gnn_block.3} parent=0 // loop_exit
    _

// kernel: gnn_block.2
$region0: #{gnn_block.2}
  #allocation0 [shape = 'u32[]', space=smem, size = 0x4, offset = 0x4, fixed_abs, tag = 'smem constant byte address 0x4 - core index']
  #allocation1 [shape = 'u32[144,128]{1,0:T(1,128)}', space=vmem, size = 0x12000, scoped, tag = 'internal scratch']
  %s0 = inlined_call_operand.vmem [shape: bf16[384,384], index: 0, kind: input, shape index: {}]
  %s1 = inlined_call_operand.vmem [shape: bf16[384,16], index: 1, kind: input, shape index: {}]
  %s2 = inlined_call_operand.vmem [shape: f32[16,128], index: 2, kind: input, shape index: {}]
  %s3 = inlined_call_operand.vmem [shape: f32[1,128], index: 3, kind: input, shape index: {}]
  %s4 = inlined_call_operand.vmem [shape: f32[384,128], index: 4, kind: output, shape index: {0}]
  %s5 = inlined_call_operand.vmem [shape: f32[3,1,128], index: 5, kind: output, shape index: {1}]
  %s6 = inlined_call_operand.vmem [shape: f32[3,1,128], index: 6, kind: output, shape index: {2}]
  %7 = xla_tuple %s4, %s5, %s6
  %s8 = sld [smem:[#allocation0]]
  $region65: #{gnn_block.2} parent=0
    _
  %s10 = ssub.s32 1, %s8
  %s11 = scalar_select 0, %s10, %s8
  loop: start=0, step=1, limit=5
  $region2: #{gnn_block.2} parent=0 // loop_pre_header
    _
  $region3: #{gnn_block.2} parent=0 // loop_header
    %s13 = sphi 0, %s17
    %p14 = scmp.ge.s32.totalorder %s13, 5
    %s23 = sphi 0, %s25
    %s26 = sphi 0, %s23
    %s27 = sphi 0, %s26
    %s43 = sphi 0, %s27
    %s47 = sphi 0, %s47
    %s49 = sphi 0, %s47
    %s50 = sphi 0, %s49
    %s64 = sphi 0, %s50
    %s68 = sphi 0, %s68
    %s70 = sphi 0, %s68
    %s71 = sphi 0, %s70
    %s85 = sphi 0, %s71
    %s89 = sphi 0, %s89
    %s91 = sphi 0, %s89
    %s92 = sphi 0, %s91
    %s106 = sphi 0, %s92
    %s112 = sphi 0, %s114
    %s115 = sphi 0, %s112
    %s116 = sphi 0, %s115
    %s132 = sphi 0, %s116
    %s138 = sphi 0, %s140
    %s141 = sphi 0, %s138
    %s142 = sphi 0, %s141
    %s158 = sphi 0, %s142
    %s164 = sphi 0, %s166
    %s167 = sphi 0, %s164
    %s168 = sphi 0, %s167
    %s184 = sphi 0, %s168
  $region4: #{gnn_block.2} parent=0 // loop_header_branch
    %16 = sbr.rel (%p14) target = $region8
  $region5: #{gnn_block.2} parent=0 // loop_body
    %s18 = ssub.s32 %s13, 1
    %s19 = ssub.s32 %s13, 2
    %s20 = sadd.s32 %s13, 1
    %s21 = ssub.s32 %s13, %s20
    %p22 = scmp.eq.s32.totalorder %s21, 0
    %s24 = sadd.s32 %s23, 1
    %s25 = scalar_select %p22, %s23, %s24
    %p28 = pneg %p22
    %p29 = scmp.eq.s32.totalorder %s13, 2
    %p30 = por %p28, %p29
    %p31 = scmp.ne.s32.totalorder %s23, %s26
    %p32 = scmp.eq.s32.totalorder %s13, 0
    %p33 = por %p31, %p32
    %p34 = scmp.ne.s32.totalorder %s23, %s26
    %p35 = scmp.eq.s32.totalorder %s18, 2
    %p36 = por %p34, %p35
    %p37 = scmp.ne.s32.totalorder %s26, %s27
    %p38 = scmp.eq.s32.totalorder %s18, 0
    %p39 = por %p37, %p38
    %p40 = scmp.ne.s32.totalorder %s26, %s27
    %p41 = scmp.eq.s32.totalorder %s19, 2
    %p42 = por %p40, %p41
    %p44 = scmp.ne.s32.totalorder %s27, %s43
    %p45 = scmp.eq.s32.totalorder %s19, 0
    %p46 = por %p44, %p45
    %s48 = sadd.s32 %s47, 1
    %p51 = scmp.eq.s32.totalorder %s13, 2
    %p52 = scmp.ne.s32.totalorder %s47, %s49
    %p53 = scmp.eq.s32.totalorder %s13, 0
    %p54 = por %p52, %p53
    %p55 = scmp.ne.s32.totalorder %s47, %s49
    %p56 = scmp.eq.s32.totalorder %s18, 2
    %p57 = por %p55, %p56
    %p58 = scmp.ne.s32.totalorder %s49, %s50
    %p59 = scmp.eq.s32.totalorder %s18, 0
    %p60 = por %p58, %p59
    %p61 = scmp.ne.s32.totalorder %s49, %s50
    %p62 = scmp.eq.s32.totalorder %s19, 2
    %p63 = por %p61, %p62
    %p65 = scmp.ne.s32.totalorder %s50, %s64
    %p66 = scmp.eq.s32.totalorder %s19, 0
    %p67 = por %p65, %p66
    %s69 = sadd.s32 %s68, 1
    %p72 = scmp.eq.s32.totalorder %s13, 2
    %p73 = scmp.ne.s32.totalorder %s68, %s70
    %p74 = scmp.eq.s32.totalorder %s13, 0
    %p75 = por %p73, %p74
    %p76 = scmp.ne.s32.totalorder %s68, %s70
    %p77 = scmp.eq.s32.totalorder %s18, 2
    %p78 = por %p76, %p77
    %p79 = scmp.ne.s32.totalorder %s70, %s71
    %p80 = scmp.eq.s32.totalorder %s18, 0
    %p81 = por %p79, %p80
    %p82 = scmp.ne.s32.totalorder %s70, %s71
    %p83 = scmp.eq.s32.totalorder %s19, 2
    %p84 = por %p82, %p83
    %p86 = scmp.ne.s32.totalorder %s71, %s85
    %p87 = scmp.eq.s32.totalorder %s19, 0
    %p88 = por %p86, %p87
    %s90 = sadd.s32 %s89, 1
    %p93 = scmp.eq.s32.totalorder %s13, 2
    %p94 = scmp.ne.s32.totalorder %s89, %s91
    %p95 = scmp.eq.s32.totalorder %s13, 0
    %p96 = por %p94, %p95
    %p97 = scmp.ne.s32.totalorder %s89, %s91
    %p98 = scmp.eq.s32.totalorder %s18, 2
    %p99 = por %p97, %p98
    %p100 = scmp.ne.s32.totalorder %s91, %s92
    %p101 = scmp.eq.s32.totalorder %s18, 0
    %p102 = por %p100, %p101
    %p103 = scmp.ne.s32.totalorder %s91, %s92
    %p104 = scmp.eq.s32.totalorder %s19, 2
    %p105 = por %p103, %p104
    %p107 = scmp.ne.s32.totalorder %s92, %s106
    %p108 = scmp.eq.s32.totalorder %s19, 0
    %p109 = por %p107, %p108
    %s110 = ssub.s32 %s13, %s20
    %p111 = scmp.eq.s32.totalorder %s110, 0
    %s113 = sadd.s32 %s112, 1
    %s114 = scalar_select %p111, %s112, %s113
    %p117 = pneg %p111
    %p118 = scmp.eq.s32.totalorder %s13, 2
    %p119 = por %p117, %p118
    %p120 = scmp.ne.s32.totalorder %s112, %s115
    %p121 = scmp.eq.s32.totalorder %s13, 0
    %p122 = por %p120, %p121
    %p123 = scmp.ne.s32.totalorder %s112, %s115
    %p124 = scmp.eq.s32.totalorder %s18, 2
    %p125 = por %p123, %p124
    %p126 = scmp.ne.s32.totalorder %s115, %s116
    %p127 = scmp.eq.s32.totalorder %s18, 0
    %p128 = por %p126, %p127
    %p129 = scmp.ne.s32.totalorder %s115, %s116
    %p130 = scmp.eq.s32.totalorder %s19, 2
    %p131 = por %p129, %p130
    %p133 = scmp.ne.s32.totalorder %s116, %s132
    %p134 = scmp.eq.s32.totalorder %s19, 0
    %p135 = por %p133, %p134
    %s136 = ssub.s32 %s13, %s20
    %p137 = scmp.eq.s32.totalorder %s136, 0
    %s139 = sadd.s32 %s138, 1
    %s140 = scalar_select %p137, %s138, %s139
    %p143 = pneg %p137
    %p144 = scmp.eq.s32.totalorder %s13, 2
    %p145 = por %p143, %p144
    %p146 = scmp.ne.s32.totalorder %s138, %s141
    %p147 = scmp.eq.s32.totalorder %s13, 0
    %p148 = por %p146, %p147
    %p149 = scmp.ne.s32.totalorder %s138, %s141
    %p150 = scmp.eq.s32.totalorder %s18, 2
    %p151 = por %p149, %p150
    %p152 = scmp.ne.s32.totalorder %s141, %s142
    %p153 = scmp.eq.s32.totalorder %s18, 0
    %p154 = por %p152, %p153
    %p155 = scmp.ne.s32.totalorder %s141, %s142
    %p156 = scmp.eq.s32.totalorder %s19, 2
    %p157 = por %p155, %p156
    %p159 = scmp.ne.s32.totalorder %s142, %s158
    %p160 = scmp.eq.s32.totalorder %s19, 0
    %p161 = por %p159, %p160
    %s162 = ssub.s32 %s13, %s20
    %p163 = scmp.eq.s32.totalorder %s162, 0
    %s165 = sadd.s32 %s164, 1
    %s166 = scalar_select %p163, %s164, %s165
    %p169 = pneg %p163
    %p170 = scmp.eq.s32.totalorder %s13, 2
    %p171 = por %p169, %p170
    %p172 = scmp.ne.s32.totalorder %s164, %s167
    %p173 = scmp.eq.s32.totalorder %s13, 0
    %p174 = por %p172, %p173
    %p175 = scmp.ne.s32.totalorder %s164, %s167
    %p176 = scmp.eq.s32.totalorder %s18, 2
    %p177 = por %p175, %p176
    %p178 = scmp.ne.s32.totalorder %s167, %s168
    %p179 = scmp.eq.s32.totalorder %s18, 0
    %p180 = por %p178, %p179
    %p181 = scmp.ne.s32.totalorder %s167, %s168
    %p182 = scmp.eq.s32.totalorder %s19, 2
    %p183 = por %p181, %p182
    %p185 = scmp.ne.s32.totalorder %s168, %s184
    %p186 = scmp.eq.s32.totalorder %s19, 0
    %p187 = por %p185, %p186
    %p188 = scmp.le.s32.totalorder 1, %s13
    %p189 = scmp.lt.s32.totalorder %s13, 4
    %p190 = pnand %p188, %p189
    %p191 = pneg %p190
    // Predicated region
    $region9: #{gnn_block.2} parent=5 // pred_check
      _
    $region10: #{gnn_block.2} parent=5 // pred_check_branch
      %193 = sbr.rel (%p190) target = $region12
    $region11: #{gnn_block.2} parent=5 // pred_region
      %s194 = ssub.s32 %s13, 1
      // Predicated region
      $region13: #{gnn_block.2} parent=11 // pred_check
        %p195 = pneg %p60
      $region14: #{gnn_block.2} parent=11 // pred_check_branch
        %197 = sbr.rel (%p195) target = $region16
      $region15: #{gnn_block.2} parent=11 // pred_region
        _
      $region16: #{gnn_block.2} parent=11 // pred_fallthru
        _
      // Predicated region
      $region17: #{gnn_block.2} parent=11 // pred_check
        %p198 = pneg %p81
      $region18: #{gnn_block.2} parent=11 // pred_check_branch
        %200 = sbr.rel (%p198) target = $region20
      $region19: #{gnn_block.2} parent=11 // pred_region
        _
      $region20: #{gnn_block.2} parent=11 // pred_fallthru
        _
      // Predicated region
      $region21: #{gnn_block.2} parent=11 // pred_check
        %p201 = pneg %p102
      $region22: #{gnn_block.2} parent=11 // pred_check_branch
        %203 = sbr.rel (%p201) target = $region24
      $region23: #{gnn_block.2} parent=11 // pred_region
        _
      $region24: #{gnn_block.2} parent=11 // pred_fallthru
        _
    $region12: #{gnn_block.2} parent=5 // pred_fallthru
      _
    %p204 = scmp.lt.s32.totalorder %s13, 3
    // Predicated region
    $region25: #{gnn_block.2} parent=5 // pred_check
      %p205 = pneg %p204
    $region26: #{gnn_block.2} parent=5 // pred_check_branch
      %207 = sbr.rel (%p205) target = $region28
    $region27: #{gnn_block.2} parent=5 // pred_region
      // Predicated region
      $region29: #{gnn_block.2} parent=27 // pred_check
        %p208 = pneg %p33
      $region30: #{gnn_block.2} parent=27 // pred_check_branch
        %210 = sbr.rel (%p208) target = $region32
      $region31: #{gnn_block.2} parent=27 // pred_region
        %s211 = smul.u32 16, %s13
        %p212 = scmp.lt.s32.totalorder %s211, 47
        %s213 = scalar_select %p212, %s211, 47
        %s214 = smul.addr %s213, 3
        %s215 = smul.addr %s214, 4
        %s216 = scalar_lea.vmem %s0, %s215
        %s217 = smul.u32 16, %s13
      $region32: #{gnn_block.2} parent=27 // pred_fallthru
        _
    $region28: #{gnn_block.2} parent=5 // pred_fallthru
      _
    %p218 = scmp.le.s32.totalorder 1, %s13
    %p219 = scmp.lt.s32.totalorder %s13, 4
    %p220 = pnand %p218, %p219
    %p221 = pneg %p220
    // Predicated region
    $region33: #{gnn_block.2} parent=5 // pred_check
      _
    $region34: #{gnn_block.2} parent=5 // pred_check_branch
      %223 = sbr.rel (%p220) target = $region36
    $region35: #{gnn_block.2} parent=5 // pred_region
      %s224 = ssub.s32 %s13, 1
      %s225 = smul.u32 16, %s18
      %p226 = scmp.lt.s32.totalorder %s225, 47
      %s227 = scalar_select %p226, %s225, 47
      %s228 = smul.addr %s227, 3
      %s229 = smul.addr %s228, 4
      %s230 = scalar_lea.vmem %s0, %s229
      %p231 = pneg %p39
      %p232 = pneg %p36
      %p233 = pneg %p60
      %p234 = pneg %p57
      %p235 = pneg %p81
      %p236 = pneg %p78
      %p237 = pneg %p102
      %p238 = pneg %p99
      %p239 = pneg %p128
      %p240 = pneg %p125
      %s241 = smul.u32 16, %s18
      %p242 = scmp.lt.s32.totalorder %s241, 47
      %s243 = scalar_select %p242, %s241, 47
      %s244 = smul.addr %s243, 8
      %s245 = scalar_lea.vmem %s4, %s244
      %p246 = pneg %p154
      %p247 = pneg %p151
      %p248 = scmp.lt.s32.totalorder %s18, 2
      %s249 = scalar_select %p248, %s18, 2
      %s250 = scalar_lea.vmem %s5, %s249
      %p251 = pneg %p180
      %p252 = pneg %p177
      %p253 = scmp.lt.s32.totalorder %s18, 2
      %s254 = scalar_select %p253, %s18, 2
      %s255 = scalar_lea.vmem %s6, %s254
      %s256 = smul.u32 16, %s18
      %p257 = scmp.lt.s32.totalorder %s256, 47
      %s258 = scalar_select %p257, %s256, 47
      %s259 = smul.addr %s258, 3
      %s260 = smul.addr %s259, 4
      %s261 = scalar_lea.vmem %s0, %s260
      %s262 = smul.u32 16, %s18
      %s263 = smul.u32 16, %s18
      %p264 = scmp.lt.s32.totalorder %s263, 47
      %s265 = scalar_select %p264, %s263, 47
      %s266 = smul.addr %s265, 8
      %s267 = scalar_lea.vmem %s4, %s266
      %s268 = smul.u32 16, %s18
      %p269 = scmp.lt.s32.totalorder %s18, 2
      %s270 = scalar_select %p269, %s18, 2
      %s271 = scalar_lea.vmem %s5, %s270
      %p272 = scmp.lt.s32.totalorder %s18, 2
      %s273 = scalar_select %p272, %s18, 2
      %s274 = scalar_lea.vmem %s6, %s273
      %v276 = vld [vmem:[%s261] sm:$0xff]
      %v277 = vld [vmem:[%s261 + $0x8] sm:$0xf]
      %v278 = vld [vmem:[%s261 + $0xc] sm:$0xff]
      %v279 = vld [vmem:[%s261 + $0x14] sm:$0xf]
      %v280 = vld [vmem:[%s261 + $0x18] sm:$0xff]
      %v281 = vld [vmem:[%s261 + $0x20] sm:$0xf]
      %v282 = vld [vmem:[%s261 + $0x24] sm:$0xff]
      %v283 = vld [vmem:[%s261 + $0x2c] sm:$0xf]
      %v284 = vld [vmem:[%s261 + $0x30] sm:$0xff]
      %v285 = vld [vmem:[%s261 + $0x38] sm:$0xf]
      %v286 = vld [vmem:[%s261 + $0x3c] sm:$0xff]
      %v287 = vld [vmem:[%s261 + $0x44] sm:$0xf]
      %v288 = vld [vmem:[%s261 + $0x48] sm:$0xff]
      %v289 = vld [vmem:[%s261 + $0x50] sm:$0xf]
      %v290 = vld [vmem:[%s261 + $0x54] sm:$0xff]
      %v291 = vld [vmem:[%s261 + $0x5c] sm:$0xf]
      %v292 = vld [vmem:[%s261 + $0x60] sm:$0xff]
      %v293 = vld [vmem:[%s261 + $0x68] sm:$0xf]
      %v294 = vld [vmem:[%s261 + $0x6c] sm:$0xff]
      %v295 = vld [vmem:[%s261 + $0x74] sm:$0xf]
      %v296 = vld [vmem:[%s261 + $0x78] sm:$0xff]
      %v297 = vld [vmem:[%s261 + $0x80] sm:$0xf]
      %v298 = vld [vmem:[%s261 + $0x84] sm:$0xff]
      %v299 = vld [vmem:[%s261 + $0x8c] sm:$0xf]
      %v300 = vld [vmem:[%s261 + $0x90] sm:$0xff]
      %v301 = vld [vmem:[%s261 + $0x98] sm:$0xf]
      %v302 = vld [vmem:[%s261 + $0x9c] sm:$0xff]
      %v303 = vld [vmem:[%s261 + $0xa4] sm:$0xf]
      %v304 = vld [vmem:[%s261 + $0xa8] sm:$0xff]
      %v305 = vld [vmem:[%s261 + $0xb0] sm:$0xf]
      %v306 = vld [vmem:[%s261 + $0xb4] sm:$0xff]
      %v307 = vld [vmem:[%s261 + $0xbc] sm:$0xf]
      %v308 = vld [vmem:[%s1] sm:$0xf]
      %v309 = vld [vmem:[%s1 + $0x4] sm:$0xf]
      %v310 = vld [vmem:[%s1 + $0x8] sm:$0xf]
      %v311 = vld [vmem:[%s1 + $0xc] sm:$0xf]
      %v312 = vld [vmem:[%s1 + $0x10] sm:$0xf]
      %v313 = vld [vmem:[%s1 + $0x14] sm:$0xf]
      %v314 = vld [vmem:[%s1 + $0x18] sm:$0xf]
      %v315 = vld [vmem:[%s1 + $0x1c] sm:$0xf]
      %v316 = vld [vmem:[%s1 + $0x20] sm:$0xf]
      %v317 = vld [vmem:[%s1 + $0x24] sm:$0xf]
      %v318 = vld [vmem:[%s1 + $0x28] sm:$0xf]
      %v319 = vld [vmem:[%s1 + $0x2c] sm:$0xf]
      %v320 = vld [vmem:[%s1 + $0x30] sm:$0xf]
      %v321 = vld [vmem:[%s1 + $0x34] sm:$0xf]
      %v322 = vld [vmem:[%s1 + $0x38] sm:$0xf]
      %v323 = vld [vmem:[%s1 + $0x3c] sm:$0xf]
      %v324 = vld [vmem:[%s1 + $0x40] sm:$0xf]
      %v325 = vld [vmem:[%s1 + $0x44] sm:$0xf]
      %v326 = vld [vmem:[%s1 + $0x48] sm:$0xf]
      %v327 = vld [vmem:[%s1 + $0x4c] sm:$0xf]
      %v328 = vld [vmem:[%s1 + $0x50] sm:$0xf]
      %v329 = vld [vmem:[%s1 + $0x54] sm:$0xf]
      %v330 = vld [vmem:[%s1 + $0x58] sm:$0xf]
      %v331 = vld [vmem:[%s1 + $0x5c] sm:$0xf]
      %v332 = vld [vmem:[%s1 + $0x60] sm:$0xf]
      %v333 = vld [vmem:[%s1 + $0x64] sm:$0xf]
      %v334 = vld [vmem:[%s1 + $0x68] sm:$0xf]
      %v335 = vld [vmem:[%s1 + $0x6c] sm:$0xf]
      %v336 = vld [vmem:[%s1 + $0x70] sm:$0xf]
      %v337 = vld [vmem:[%s1 + $0x74] sm:$0xf]
      %v338 = vld [vmem:[%s1 + $0x78] sm:$0xf]
      %v339 = vld [vmem:[%s1 + $0x7c] sm:$0xf]
      %v340 = vld [vmem:[%s1 + $0x80] sm:$0xf]
      %v341 = vld [vmem:[%s1 + $0x84] sm:$0xf]
      %v342 = vld [vmem:[%s1 + $0x88] sm:$0xf]
      %v343 = vld [vmem:[%s1 + $0x8c] sm:$0xf]
      %v344 = vld [vmem:[%s1 + $0x90] sm:$0xf]
      %v345 = vld [vmem:[%s1 + $0x94] sm:$0xf]
      %v346 = vld [vmem:[%s1 + $0x98] sm:$0xf]
      %v347 = vld [vmem:[%s1 + $0x9c] sm:$0xf]
      %v348 = vld [vmem:[%s1 + $0xa0] sm:$0xf]
      %v349 = vld [vmem:[%s1 + $0xa4] sm:$0xf]
      %v350 = vld [vmem:[%s1 + $0xa8] sm:$0xf]
      %v351 = vld [vmem:[%s1 + $0xac] sm:$0xf]
      %v352 = vld [vmem:[%s1 + $0xb0] sm:$0xf]
      %v353 = vld [vmem:[%s1 + $0xb4] sm:$0xf]
      %v354 = vld [vmem:[%s1 + $0xb8] sm:$0xf]
      %v355 = vld [vmem:[%s1 + $0xbc] sm:$0xf]
      %v388 = vunpack.c.l.b16 %v276
      %v389 = vunpack.c.h.b16 %v276
      %v390 = vunpack.c.l.b16 %v277
      %v391 = vunpack.c.l.b16 %v278
      %v392 = vunpack.c.h.b16 %v278
      %v393 = vunpack.c.l.b16 %v279
      %v394 = vunpack.c.l.b16 %v280
      %v395 = vunpack.c.h.b16 %v280
      %v396 = vunpack.c.l.b16 %v281
      %v397 = vunpack.c.l.b16 %v282
      %v398 = vunpack.c.h.b16 %v282
      %v399 = vunpack.c.l.b16 %v283
      %v400 = vunpack.c.l.b16 %v284
      %v401 = vunpack.c.h.b16 %v284
      %v402 = vunpack.c.l.b16 %v285
      %v403 = vunpack.c.l.b16 %v286
      %v404 = vunpack.c.h.b16 %v286
      %v405 = vunpack.c.l.b16 %v287
      %v406 = vunpack.c.l.b16 %v288
      %v407 = vunpack.c.h.b16 %v288
      %v408 = vunpack.c.l.b16 %v289
      %v409 = vunpack.c.l.b16 %v290
      %v410 = vunpack.c.h.b16 %v290
      %v411 = vunpack.c.l.b16 %v291
      %v412 = vunpack.c.l.b16 %v292
      %v413 = vunpack.c.h.b16 %v292
      %v414 = vunpack.c.l.b16 %v293
      %v415 = vunpack.c.l.b16 %v294
      %v416 = vunpack.c.h.b16 %v294
      %v417 = vunpack.c.l.b16 %v295
      %v418 = vunpack.c.l.b16 %v296
      %v419 = vunpack.c.h.b16 %v296
      %v420 = vunpack.c.l.b16 %v297
      %v421 = vunpack.c.l.b16 %v298
      %v422 = vunpack.c.h.b16 %v298
      %v423 = vunpack.c.l.b16 %v299
      %v424 = vunpack.c.l.b16 %v300
      %v425 = vunpack.c.h.b16 %v300
      %v426 = vunpack.c.l.b16 %v301
      %v427 = vunpack.c.l.b16 %v302
      %v428 = vunpack.c.h.b16 %v302
      %v429 = vunpack.c.l.b16 %v303
      %v430 = vunpack.c.l.b16 %v304
      %v431 = vunpack.c.h.b16 %v304
      %v432 = vunpack.c.l.b16 %v305
      %v433 = vunpack.c.l.b16 %v306
      %v434 = vunpack.c.h.b16 %v306
      %v435 = vunpack.c.l.b16 %v307
      %v436 = vpack.c.b16 %v391, %v388
      %v437 = vpack.c.b16 %v392, %v389
      %v438 = vpack.c.b16 %v393, %v390
      %v439 = vpack.c.b16 %v397, %v394
      %v440 = vpack.c.b16 %v398, %v395
      %v441 = vpack.c.b16 %v399, %v396
      %v442 = vpack.c.b16 %v403, %v400
      %v443 = vpack.c.b16 %v404, %v401
      %v444 = vpack.c.b16 %v405, %v402
      %v445 = vpack.c.b16 %v409, %v406
      %v446 = vpack.c.b16 %v410, %v407
      %v447 = vpack.c.b16 %v411, %v408
      %v448 = vpack.c.b16 %v415, %v412
      %v449 = vpack.c.b16 %v416, %v413
      %v450 = vpack.c.b16 %v417, %v414
      %v451 = vpack.c.b16 %v421, %v418
      %v452 = vpack.c.b16 %v422, %v419
      %v453 = vpack.c.b16 %v423, %v420
      %v454 = vpack.c.b16 %v427, %v424
      %v455 = vpack.c.b16 %v428, %v425
      %v456 = vpack.c.b16 %v429, %v426
      %v457 = vpack.c.b16 %v433, %v430
      %v458 = vpack.c.b16 %v434, %v431
      %v459 = vpack.c.b16 %v435, %v432
      %v532 = vunpack.c.l.b16 %v308
      %v533 = vunpack.c.l.b16 %v309
      %v534 = vunpack.c.l.b16 %v310
      %v535 = vunpack.c.l.b16 %v311
      %v536 = vunpack.c.l.b16 %v312
      %v537 = vunpack.c.l.b16 %v313
      %v538 = vunpack.c.l.b16 %v314
      %v539 = vunpack.c.l.b16 %v315
      %v540 = vunpack.c.l.b16 %v316
      %v541 = vunpack.c.l.b16 %v317
      %v542 = vunpack.c.l.b16 %v318
      %v543 = vunpack.c.l.b16 %v319
      %v544 = vunpack.c.l.b16 %v320
      %v545 = vunpack.c.l.b16 %v321
      %v546 = vunpack.c.l.b16 %v322
      %v547 = vunpack.c.l.b16 %v323
      %v548 = vunpack.c.l.b16 %v324
      %v549 = vunpack.c.l.b16 %v325
      %v550 = vunpack.c.l.b16 %v326
      %v551 = vunpack.c.l.b16 %v327
      %v552 = vunpack.c.l.b16 %v328
      %v553 = vunpack.c.l.b16 %v329
      %v554 = vunpack.c.l.b16 %v330
      %v555 = vunpack.c.l.b16 %v331
      %v556 = vunpack.c.l.b16 %v332
      %v557 = vunpack.c.l.b16 %v333
      %v558 = vunpack.c.l.b16 %v334
      %v559 = vunpack.c.l.b16 %v335
      %v560 = vunpack.c.l.b16 %v336
      %v561 = vunpack.c.l.b16 %v337
      %v562 = vunpack.c.l.b16 %v338
      %v563 = vunpack.c.l.b16 %v339
      %v564 = vunpack.c.l.b16 %v340
      %v565 = vunpack.c.l.b16 %v341
      %v566 = vunpack.c.l.b16 %v342
      %v567 = vunpack.c.l.b16 %v343
      %v568 = vunpack.c.l.b16 %v344
      %v569 = vunpack.c.l.b16 %v345
      %v570 = vunpack.c.l.b16 %v346
      %v571 = vunpack.c.l.b16 %v347
      %v572 = vunpack.c.l.b16 %v348
      %v573 = vunpack.c.l.b16 %v349
      %v574 = vunpack.c.l.b16 %v350
      %v575 = vunpack.c.l.b16 %v351
      %v576 = vunpack.c.l.b16 %v352
      %v577 = vunpack.c.l.b16 %v353
      %v578 = vunpack.c.l.b16 %v354
      %v579 = vunpack.c.l.b16 %v355
      %v580 = vpack.c.b16 %v533, %v532
      %v581 = vpack.c.b16 %v535, %v534
      %v582 = vpack.c.b16 %v537, %v536
      %v583 = vpack.c.b16 %v539, %v538
      %v584 = vpack.c.b16 %v541, %v540
      %v585 = vpack.c.b16 %v543, %v542
      %v586 = vpack.c.b16 %v545, %v544
      %v587 = vpack.c.b16 %v547, %v546
      %v588 = vpack.c.b16 %v549, %v548
      %v589 = vpack.c.b16 %v551, %v550
      %v590 = vpack.c.b16 %v553, %v552
      %v591 = vpack.c.b16 %v555, %v554
      %v592 = vpack.c.b16 %v557, %v556
      %v593 = vpack.c.b16 %v559, %v558
      %v594 = vpack.c.b16 %v561, %v560
      %v595 = vpack.c.b16 %v563, %v562
      %v596 = vpack.c.b16 %v565, %v564
      %v597 = vpack.c.b16 %v567, %v566
      %v598 = vpack.c.b16 %v569, %v568
      %v599 = vpack.c.b16 %v571, %v570
      %v600 = vpack.c.b16 %v573, %v572
      %v601 = vpack.c.b16 %v575, %v574
      %v602 = vpack.c.b16 %v577, %v576
      %v603 = vpack.c.b16 %v579, %v578
      %628 = vmatprep.subr.bf16.mxu0 0
      %629 = vmatpush1.bf16.msra.mxu0 %v580
      %630 = vmatprep.subr.bf16.mxu0 0
      %631 = vmatpush1.bf16.msra.mxu0 %v581
      %632 = vmatprep.subr.bf16.mxu0 0
      %633 = vmatpush1.bf16.msra.mxu0 %v582
      %634 = vmatprep.subr.bf16.mxu0 0
      %635 = vmatpush1.bf16.msra.mxu0 %v583
      %636 = vmatprep.subr.bf16.mxu0 0
      %637 = vmatpush1.bf16.msra.mxu0 %v584
      %638 = vmatprep.subr.bf16.mxu0 0
      %639 = vmatpush1.bf16.msra.mxu0 %v585
      %640 = vmatprep.subr.bf16.mxu0 0
      %641 = vmatpush1.bf16.msra.mxu0 %v586
      %642 = vmatprep.subr.bf16.mxu0 0
      %643 = vmatpush1.bf16.msra.mxu0 %v587
      %644 = vmatprep.subr.bf16.mxu0 0
      %645 = vmatpush1.bf16.msra.mxu0 %v588
      %646 = vmatprep.subr.bf16.mxu0 0
      %647 = vmatpush1.bf16.msra.mxu0 %v589
      %648 = vmatprep.subr.bf16.mxu0 0
      %649 = vmatpush1.bf16.msra.mxu0 %v590
      %650 = vmatprep.subr.bf16.mxu0 0
      %651 = vmatpush1.bf16.msra.mxu0 %v591
      %652 = vmatprep.subr.bf16.mxu0 0
      %653 = vmatpush1.bf16.msra.mxu0 %v592
      %654 = vmatprep.subr.bf16.mxu0 0
      %655 = vmatpush1.bf16.msra.mxu0 %v593
      %656 = vmatprep.subr.bf16.mxu0 0
      %657 = vmatpush1.bf16.msra.mxu0 %v594
      %658 = vmatprep.subr.bf16.mxu0 0
      %659 = vmatpush1.bf16.msra.mxu0 %v595
      %660 = vmatprep.mubr.bf16.mxu0 %v437
      %661 = vmatmul.mubr.bf16.gmra.mrb[0].mxu0 %v436
      %v662 = vpop.f32.mrb[0].mxu0
      %v663 = vadd.f32 0.0, %v662
      %v664 = vpop.f32.mrb[0].mxu0
      %v665 = vpop.f32.mrb[0].mxu0
      %v666 = vadd.f32 0.0, %v665
      %v667 = vpop.f32.mrb[0].mxu0
      %668 = vmatprep.mubr.bf16.mxu0 %v440
      %669 = vmatmul.mubr.bf16.gmra.mrb[0].mxu0 %v439
      %v670 = vpop.f32.mrb[0].mxu0
      %v671 = vadd.f32 0.0, %v670
      %v672 = vpop.f32.mrb[0].mxu0
      %v673 = vpop.f32.mrb[0].mxu0
      %v674 = vadd.f32 0.0, %v673
      %v675 = vpop.f32.mrb[0].mxu0
      %676 = vmatprep.mubr.bf16.mxu0 %v443
      %677 = vmatmul.mubr.bf16.gmra.mrb[0].mxu0 %v442
      %v678 = vpop.f32.mrb[0].mxu0
      %v679 = vadd.f32 0.0, %v678
      %v680 = vpop.f32.mrb[0].mxu0
      %v681 = vpop.f32.mrb[0].mxu0
      %v682 = vadd.f32 0.0, %v681
      %v683 = vpop.f32.mrb[0].mxu0
      %684 = vmatprep.mubr.bf16.mxu0 %v446
      %685 = vmatmul.mubr.bf16.gmra.mrb[0].mxu0 %v445
      %v686 = vpop.f32.mrb[0].mxu0
      %v687 = vadd.f32 0.0, %v686
      %v688 = vpop.f32.mrb[0].mxu0
      %v689 = vpop.f32.mrb[0].mxu0
      %v690 = vadd.f32 0.0, %v689
      %v691 = vpop.f32.mrb[0].mxu0
      %692 = vmatprep.mubr.bf16.mxu0 %v449
      %693 = vmatmul.mubr.bf16.gmra.mrb[0].mxu0 %v448
      %v694 = vpop.f32.mrb[0].mxu0
      %v695 = vadd.f32 0.0, %v694
      %v696 = vpop.f32.mrb[0].mxu0
      %v697 = vpop.f32.mrb[0].mxu0
      %v698 = vadd.f32 0.0, %v697
      %v699 = vpop.f32.mrb[0].mxu0
      %700 = vmatprep.mubr.bf16.mxu0 %v452
      %701 = vmatmul.mubr.bf16.gmra.mrb[0].mxu0 %v451
      %v702 = vpop.f32.mrb[0].mxu0
      %v703 = vadd.f32 0.0, %v702
      %v704 = vpop.f32.mrb[0].mxu0
      %v705 = vpop.f32.mrb[0].mxu0
      %v706 = vadd.f32 0.0, %v705
      %v707 = vpop.f32.mrb[0].mxu0
      %708 = vmatprep.mubr.bf16.mxu0 %v455
      %709 = vmatmul.mubr.bf16.gmra.mrb[0].mxu0 %v454
      %v710 = vpop.f32.mrb[0].mxu0
      %v711 = vadd.f32 0.0, %v710
      %v712 = vpop.f32.mrb[0].mxu0
      %v713 = vpop.f32.mrb[0].mxu0
      %v714 = vadd.f32 0.0, %v713
      %v715 = vpop.f32.mrb[0].mxu0
      %716 = vmatprep.mubr.bf16.mxu0 %v458
      %717 = vmatmul.mubr.bf16.gmra.mrb[0].mxu0 %v457
      %v718 = vpop.f32.mrb[0].mxu0
      %v719 = vadd.f32 0.0, %v718
      %v720 = vpop.f32.mrb[0].mxu0
      %v721 = vpop.f32.mrb[0].mxu0
      %v722 = vadd.f32 0.0, %v721
      %v723 = vpop.f32.mrb[0].mxu0
      %724 = vdwg.mxu0
      %725 = vmatprep.subr.bf16.mxu0 0
      %726 = vmatpush1.bf16.msra.mxu0 %v596
      %727 = vmatprep.subr.bf16.mxu0 0
      %728 = vmatpush1.bf16.msra.mxu0 %v597
      %729 = vmatprep.subr.bf16.mxu0 0
      %730 = vmatpush1.bf16.msra.mxu0 %v598
      %731 = vmatprep.subr.bf16.mxu0 0
      %732 = vmatpush1.bf16.msra.mxu0 %v599
      %733 = vmatprep.subr.bf16.mxu0 0
      %734 = vmatpush1.bf16.msra.mxu0 %v600
      %735 = vmatprep.subr.bf16.mxu0 0
      %736 = vmatpush1.bf16.msra.mxu0 %v601
      %737 = vmatprep.subr.bf16.mxu0 0
      %738 = vmatpush1.bf16.msra.mxu0 %v602
      %739 = vmatprep.subr.bf16.mxu0 0
      %740 = vmatpush1.bf16.msra.mxu0 %v603
      %741 = vmatprep.subr.bf16.mxu0 0
      %742 = vmatpush1.bf16.msra.mxu0 0
      %743 = vmatprep.subr.bf16.mxu0 0
      %744 = vmatpush1.bf16.msra.mxu0 0
      %745 = vmatprep.subr.bf16.mxu0 0
      %746 = vmatpush1.bf16.msra.mxu0 0
      %747 = vmatprep.subr.bf16.mxu0 0
      %748 = vmatpush1.bf16.msra.mxu0 0
      %749 = vmatprep.subr.bf16.mxu0 0
      %750 = vmatpush1.bf16.msra.mxu0 0
      %751 = vmatprep.subr.bf16.mxu0 0
      %752 = vmatpush1.bf16.msra.mxu0 0
      %753 = vmatprep.subr.bf16.mxu0 0
      %754 = vmatpush1.bf16.msra.mxu0 0
      %755 = vmatprep.subr.bf16.mxu0 0
      %756 = vmatpush1.bf16.msra.mxu0 0
      %757 = vmatprep.mubr.bf16.mxu0 0
      %758 = vmatmul.mubr.bf16.gmra.mrb[0].mxu0 %v438
      %v759 = vpop.f32.mrb[0].mxu0
      %v760 = vadd.f32 %v663, %v759
      %v761 = vpop.f32.mrb[0].mxu0
      %v762 = vpop.f32.mrb[0].mxu0
      %v763 = vadd.f32 %v666, %v762
      %v764 = vpop.f32.mrb[0].mxu0
      %765 = vmatprep.mubr.bf16.mxu0 0
      %766 = vmatmul.mubr.bf16.gmra.mrb[0].mxu0 %v441
      %v767 = vpop.f32.mrb[0].mxu0
      %v768 = vadd.f32 %v671, %v767
      %v769 = vpop.f32.mrb[0].mxu0
      %v770 = vpop.f32.mrb[0].mxu0
      %v771 = vadd.f32 %v674, %v770
      %v772 = vpop.f32.mrb[0].mxu0
      %773 = vmatprep.mubr.bf16.mxu0 0
      %774 = vmatmul.mubr.bf16.gmra.mrb[0].mxu0 %v444
      %v775 = vpop.f32.mrb[0].mxu0
      %v776 = vadd.f32 %v679, %v775
      %v777 = vpop.f32.mrb[0].mxu0
      %v778 = vpop.f32.mrb[0].mxu0
      %v779 = vadd.f32 %v682, %v778
      %v780 = vpop.f32.mrb[0].mxu0
      %781 = vmatprep.mubr.bf16.mxu0 0
      %782 = vmatmul.mubr.bf16.gmra.mrb[0].mxu0 %v447
      %v783 = vpop.f32.mrb[0].mxu0
      %v784 = vadd.f32 %v687, %v783
      %v785 = vpop.f32.mrb[0].mxu0
      %v786 = vpop.f32.mrb[0].mxu0
      %v787 = vadd.f32 %v690, %v786
      %v788 = vpop.f32.mrb[0].mxu0
      %789 = vmatprep.mubr.bf16.mxu0 0
      %790 = vmatmul.mubr.bf16.gmra.mrb[0].mxu0 %v450
      %v791 = vpop.f32.mrb[0].mxu0
      %v792 = vadd.f32 %v695, %v791
      %v793 = vpop.f32.mrb[0].mxu0
      %v794 = vpop.f32.mrb[0].mxu0
      %v795 = vadd.f32 %v698, %v794
      %v796 = vpop.f32.mrb[0].mxu0
      %797 = vmatprep.mubr.bf16.mxu0 0
      %798 = vmatmul.mubr.bf16.gmra.mrb[0].mxu0 %v453
      %v799 = vpop.f32.mrb[0].mxu0
      %v800 = vadd.f32 %v703, %v799
      %v801 = vpop.f32.mrb[0].mxu0
      %v802 = vpop.f32.mrb[0].mxu0
      %v803 = vadd.f32 %v706, %v802
      %v804 = vpop.f32.mrb[0].mxu0
      %805 = vmatprep.mubr.bf16.mxu0 0
      %806 = vmatmul.mubr.bf16.gmra.mrb[0].mxu0 %v456
      %v807 = vpop.f32.mrb[0].mxu0
      %v808 = vadd.f32 %v711, %v807
      %v809 = vpop.f32.mrb[0].mxu0
      %v810 = vpop.f32.mrb[0].mxu0
      %v811 = vadd.f32 %v714, %v810
      %v812 = vpop.f32.mrb[0].mxu0
      %813 = vmatprep.mubr.bf16.mxu0 0
      %814 = vmatmul.mubr.bf16.gmra.mrb[0].mxu0 %v459
      %v815 = vpop.f32.mrb[0].mxu0
      %v816 = vadd.f32 %v719, %v815
      %v817 = vpop.f32.mrb[0].mxu0
      %v818 = vpop.f32.mrb[0].mxu0
      %v819 = vadd.f32 %v722, %v818
      %v820 = vpop.f32.mrb[0].mxu0
      %821 = vdwg.mxu0
      %v822 = vld [vmem:[%s2] sm:$0xff]
      %v823 = vld [vmem:[%s2 + $0x8] sm:$0xff]
      %v824 = vld [vmem:[%s3] sm:$0x1]
      %v826 = vlaneseq
      %v827 = vshrl.u32 %v826, 7
      %v828 = vsub.s32 0, %v827
      %v829 = vrot.slane %v824, %v828
      %vm831 = vcmask 130048
      %v833 = vsel %vm831, %v760, 0
      %v836 = vsel %vm831, %v763, 0
      %v839 = vsel %vm831, %v768, 0
      %v842 = vsel %vm831, %v771, 0
      %v845 = vsel %vm831, %v776, 0
      %v848 = vsel %vm831, %v779, 0
      %v851 = vsel %vm831, %v784, 0
      %v854 = vsel %vm831, %v787, 0
      %v857 = vsel %vm831, %v792, 0
      %v860 = vsel %vm831, %v795, 0
      %v863 = vsel %vm831, %v800, 0
      %v866 = vsel %vm831, %v803, 0
      %v869 = vsel %vm831, %v808, 0
      %v872 = vsel %vm831, %v811, 0
      %v875 = vsel %vm831, %v816, 0
      %v878 = vsel %vm831, %v819, 0
      %880 = vmatprep.subr.mxu0 0.0
      %881 = vmatpush1.msra.mxu0 %v822
      %882 = vmatprep.subr.mxu0 0.0
      %883 = vmatpush1.msra.mxu0 %v823
      %884 = vmatprep.subr.mxu0 0.0
      %885 = vmatpush1.msra.mxu0 0.0
      %886 = vmatprep.subr.mxu0 0.0
      %887 = vmatpush1.msra.mxu0 0.0
      %888 = vmatprep.subr.mxu0 0.0
      %889 = vmatpush1.msra.mxu0 0.0
      %890 = vmatprep.subr.mxu0 0.0
      %891 = vmatpush1.msra.mxu0 0.0
      %892 = vmatprep.subr.mxu0 0.0
      %893 = vmatpush1.msra.mxu0 0.0
      %894 = vmatprep.subr.mxu0 0.0
      %895 = vmatpush1.msra.mxu0 0.0
      %896 = vmatprep.subr.mxu0 0.0
      %897 = vmatpush1.msra.mxu0 0.0
      %898 = vmatprep.subr.mxu0 0.0
      %899 = vmatpush1.msra.mxu0 0.0
      %900 = vmatprep.subr.mxu0 0.0
      %901 = vmatpush1.msra.mxu0 0.0
      %902 = vmatprep.subr.mxu0 0.0
      %903 = vmatpush1.msra.mxu0 0.0
      %904 = vmatprep.subr.mxu0 0.0
      %905 = vmatpush1.msra.mxu0 0.0
      %906 = vmatprep.subr.mxu0 0.0
      %907 = vmatpush1.msra.mxu0 0.0
      %908 = vmatprep.subr.mxu0 0.0
      %909 = vmatpush1.msra.mxu0 0.0
      %910 = vmatprep.subr.mxu0 0.0
      %911 = vmatpush1.msra.mxu0 0.0
      %912 = vmatprep.subr.mxu0 0.0
      %913 = vmatpush1.msra.mxu0 0.0
      %914 = vmatprep.subr.mxu0 0.0
      %915 = vmatpush1.msra.mxu0 0.0
      %916 = vmatprep.subr.mxu0 0.0
      %917 = vmatpush1.msra.mxu0 0.0
      %918 = vmatprep.subr.mxu0 0.0
      %919 = vmatpush1.msra.mxu0 0.0
      %920 = vmatprep.subr.mxu0 0.0
      %921 = vmatpush1.msra.mxu0 0.0
      %922 = vmatprep.subr.mxu0 0.0
      %923 = vmatpush1.msra.mxu0 0.0
      %924 = vmatprep.subr.mxu0 0.0
      %925 = vmatpush1.msra.mxu0 0.0
      %926 = vmatprep.subr.mxu0 0.0
      %927 = vmatpush1.msra.mxu0 0.0
      %928 = vmatprep.subr.mxu0 0.0
      %929 = vmatpush1.msra.mxu0 0.0
      %930 = vmatprep.subr.mxu0 0.0
      %931 = vmatpush1.msra.mxu0 0.0
      %932 = vmatprep.subr.mxu0 0.0
      %933 = vmatpush1.msra.mxu0 0.0
      %934 = vmatprep.subr.mxu0 0.0
      %935 = vmatpush1.msra.mxu0 0.0
      %936 = vmatprep.subr.mxu0 0.0
      %937 = vmatpush1.msra.mxu0 0.0
      %938 = vmatprep.subr.mxu0 0.0
      %939 = vmatpush1.msra.mxu0 0.0
      %940 = vmatprep.subr.mxu0 0.0
      %941 = vmatpush1.msra.mxu0 0.0
      %942 = vmatprep.subr.mxu0 0.0
      %943 = vmatpush1.msra.mxu0 0.0
      %944 = vmatprep.mubr.f32.mxu0 0.0
      %945 = vmatmul.mubr.f32.gmra.mrb[0].mxu0 %v833
      %v946 = vpop.f32.mrb[0].mxu0
      %v947 = vadd.f32 %v829, %v946
      %v948 = vpop.f32.mrb[0].mxu0
      %949 = vmatprep.mubr.f32.mxu0 0.0
      %950 = vmatmul.mubr.f32.gmra.mrb[0].mxu0 %v836
      %v951 = vpop.f32.mrb[0].mxu0
      %v952 = vadd.f32 %v829, %v951
      %v953 = vpop.f32.mrb[0].mxu0
      %954 = vmatprep.mubr.f32.mxu0 0.0
      %955 = vmatmul.mubr.f32.gmra.mrb[0].mxu0 %v839
      %v956 = vpop.f32.mrb[0].mxu0
      %v957 = vadd.f32 %v829, %v956
      %v958 = vpop.f32.mrb[0].mxu0
      %959 = vmatprep.mubr.f32.mxu0 0.0
      %960 = vmatmul.mubr.f32.gmra.mrb[0].mxu0 %v842
      %v961 = vpop.f32.mrb[0].mxu0
      %v962 = vadd.f32 %v829, %v961
      %v963 = vpop.f32.mrb[0].mxu0
      %964 = vmatprep.mubr.f32.mxu0 0.0
      %965 = vmatmul.mubr.f32.gmra.mrb[0].mxu0 %v845
      %v966 = vpop.f32.mrb[0].mxu0
      %v967 = vadd.f32 %v829, %v966
      %v968 = vpop.f32.mrb[0].mxu0
      %969 = vmatprep.mubr.f32.mxu0 0.0
      %970 = vmatmul.mubr.f32.gmra.mrb[0].mxu0 %v848
      %v971 = vpop.f32.mrb[0].mxu0
      %v972 = vadd.f32 %v829, %v971
      %v973 = vpop.f32.mrb[0].mxu0
      %974 = vmatprep.mubr.f32.mxu0 0.0
      %975 = vmatmul.mubr.f32.gmra.mrb[0].mxu0 %v851
      %v976 = vpop.f32.mrb[0].mxu0
      %v977 = vadd.f32 %v829, %v976
      %v978 = vpop.f32.mrb[0].mxu0
      %979 = vmatprep.mubr.f32.mxu0 0.0
      %980 = vmatmul.mubr.f32.gmra.mrb[0].mxu0 %v854
      %v981 = vpop.f32.mrb[0].mxu0
      %v982 = vadd.f32 %v829, %v981
      %v983 = vpop.f32.mrb[0].mxu0
      %984 = vmatprep.mubr.f32.mxu0 0.0
      %985 = vmatmul.mubr.f32.gmra.mrb[0].mxu0 %v857
      %v986 = vpop.f32.mrb[0].mxu0
      %v987 = vadd.f32 %v829, %v986
      %v988 = vpop.f32.mrb[0].mxu0
      %989 = vmatprep.mubr.f32.mxu0 0.0
      %990 = vmatmul.mubr.f32.gmra.mrb[0].mxu0 %v860
      %v991 = vpop.f32.mrb[0].mxu0
      %v992 = vadd.f32 %v829, %v991
      %v993 = vpop.f32.mrb[0].mxu0
      %994 = vmatprep.mubr.f32.mxu0 0.0
      %995 = vmatmul.mubr.f32.gmra.mrb[0].mxu0 %v863
      %v996 = vpop.f32.mrb[0].mxu0
      %v997 = vadd.f32 %v829, %v996
      %v998 = vpop.f32.mrb[0].mxu0
      %999 = vmatprep.mubr.f32.mxu0 0.0
      %1000 = vmatmul.mubr.f32.gmra.mrb[0].mxu0 %v866
      %v1001 = vpop.f32.mrb[0].mxu0
      %v1002 = vadd.f32 %v829, %v1001
      %v1003 = vpop.f32.mrb[0].mxu0
      %1004 = vmatprep.mubr.f32.mxu0 0.0
      %1005 = vmatmul.mubr.f32.gmra.mrb[0].mxu0 %v869
      %v1006 = vpop.f32.mrb[0].mxu0
      %v1007 = vadd.f32 %v829, %v1006
      %v1008 = vpop.f32.mrb[0].mxu0
      %1009 = vmatprep.mubr.f32.mxu0 0.0
      %1010 = vmatmul.mubr.f32.gmra.mrb[0].mxu0 %v872
      %v1011 = vpop.f32.mrb[0].mxu0
      %v1012 = vadd.f32 %v829, %v1011
      %v1013 = vpop.f32.mrb[0].mxu0
      %1014 = vmatprep.mubr.f32.mxu0 0.0
      %1015 = vmatmul.mubr.f32.gmra.mrb[0].mxu0 %v875
      %v1016 = vpop.f32.mrb[0].mxu0
      %v1017 = vadd.f32 %v829, %v1016
      %v1018 = vpop.f32.mrb[0].mxu0
      %1019 = vmatprep.mubr.f32.mxu0 0.0
      %1020 = vmatmul.mubr.f32.gmra.mrb[0].mxu0 %v878
      %v1021 = vpop.f32.mrb[0].mxu0
      %v1022 = vadd.f32 %v829, %v1021
      %v1023 = vpop.f32.mrb[0].mxu0
      %1024 = vdwg.mxu0
      %v1025 = vmax.f32 %v947, 0.0
      %v1026 = vmax.f32 %v952, 0.0
      %v1027 = vmax.f32 %v957, 0.0
      %v1028 = vmax.f32 %v962, 0.0
      %v1029 = vmax.f32 %v967, 0.0
      %v1030 = vmax.f32 %v972, 0.0
      %v1031 = vmax.f32 %v977, 0.0
      %v1032 = vmax.f32 %v982, 0.0
      %v1033 = vmax.f32 %v987, 0.0
      %v1034 = vmax.f32 %v992, 0.0
      %v1035 = vmax.f32 %v997, 0.0
      %v1036 = vmax.f32 %v1002, 0.0
      %v1037 = vmax.f32 %v1007, 0.0
      %v1038 = vmax.f32 %v1012, 0.0
      %v1039 = vmax.f32 %v1017, 0.0
      %v1040 = vmax.f32 %v1022, 0.0
      %s1041 = smul.u32 %s18, 128
      %v1042 = vlaneseq
      %v1043 = vshrl.u32 %v1042, 7
      %v1044 = vadd.s32 %v1043, 8
      %v1045 = vadd.s32 %v1043, 16
      %v1046 = vadd.s32 %v1043, 24
      %v1047 = vadd.s32 %v1043, 32
      %v1048 = vadd.s32 %v1043, 40
      %v1049 = vadd.s32 %v1043, 48
      %v1050 = vadd.s32 %v1043, 56
      %v1051 = vadd.s32 %v1043, 64
      %v1052 = vadd.s32 %v1043, 72
      %v1053 = vadd.s32 %v1043, 80
      %v1054 = vadd.s32 %v1043, 88
      %v1055 = vadd.s32 %v1043, 96
      %v1056 = vadd.s32 %v1043, 104
      %v1057 = vadd.s32 %v1043, 112
      %v1058 = vadd.s32 %v1043, 120
      %v1059 = vstv %s1041
      %v1060 = vadd.s32 %v1059, %v1043
      %v1061 = vadd.s32 %v1059, %v1044
      %v1062 = vadd.s32 %v1059, %v1045
      %v1063 = vadd.s32 %v1059, %v1046
      %v1064 = vadd.s32 %v1059, %v1047
      %v1065 = vadd.s32 %v1059, %v1048
      %v1066 = vadd.s32 %v1059, %v1049
      %v1067 = vadd.s32 %v1059, %v1050
      %v1068 = vadd.s32 %v1059, %v1051
      %v1069 = vadd.s32 %v1059, %v1052
      %v1070 = vadd.s32 %v1059, %v1053
      %v1071 = vadd.s32 %v1059, %v1054
      %v1072 = vadd.s32 %v1059, %v1055
      %v1073 = vadd.s32 %v1059, %v1056
      %v1074 = vadd.s32 %v1059, %v1057
      %v1075 = vadd.s32 %v1059, %v1058
      %vm1076 = vcmp.lt.s32.totalorder %v1060, 300
      %vm1077 = vcmp.lt.s32.totalorder %v1061, 300
      %vm1078 = vcmp.lt.s32.totalorder %v1062, 300
      %vm1079 = vcmp.lt.s32.totalorder %v1063, 300
      %vm1080 = vcmp.lt.s32.totalorder %v1064, 300
      %vm1081 = vcmp.lt.s32.totalorder %v1065, 300
      %vm1082 = vcmp.lt.s32.totalorder %v1066, 300
      %vm1083 = vcmp.lt.s32.totalorder %v1067, 300
      %vm1084 = vcmp.lt.s32.totalorder %v1068, 300
      %vm1085 = vcmp.lt.s32.totalorder %v1069, 300
      %vm1086 = vcmp.lt.s32.totalorder %v1070, 300
      %vm1087 = vcmp.lt.s32.totalorder %v1071, 300
      %vm1088 = vcmp.lt.s32.totalorder %v1072, 300
      %vm1089 = vcmp.lt.s32.totalorder %v1073, 300
      %vm1090 = vcmp.lt.s32.totalorder %v1074, 300
      %vm1091 = vcmp.lt.s32.totalorder %v1075, 300
      %v1092 = vsel %vm1076, 1, 0
      %v1093 = vsel %vm1077, 1, 0
      %v1094 = vsel %vm1078, 1, 0
      %v1095 = vsel %vm1079, 1, 0
      %v1096 = vsel %vm1080, 1, 0
      %v1097 = vsel %vm1081, 1, 0
      %v1098 = vsel %vm1082, 1, 0
      %v1099 = vsel %vm1083, 1, 0
      %v1100 = vsel %vm1084, 1, 0
      %v1101 = vsel %vm1085, 1, 0
      %v1102 = vsel %vm1086, 1, 0
      %v1103 = vsel %vm1087, 1, 0
      %v1104 = vsel %vm1088, 1, 0
      %v1105 = vsel %vm1089, 1, 0
      %v1106 = vsel %vm1090, 1, 0
      %v1107 = vsel %vm1091, 1, 0
      %vm1108 = vcmp.eq.s32.totalorder %v1092, 1
      %vm1109 = vcmp.eq.s32.totalorder %v1093, 1
      %vm1110 = vcmp.eq.s32.totalorder %v1094, 1
      %vm1111 = vcmp.eq.s32.totalorder %v1095, 1
      %vm1112 = vcmp.eq.s32.totalorder %v1096, 1
      %vm1113 = vcmp.eq.s32.totalorder %v1097, 1
      %vm1114 = vcmp.eq.s32.totalorder %v1098, 1
      %vm1115 = vcmp.eq.s32.totalorder %v1099, 1
      %vm1116 = vcmp.eq.s32.totalorder %v1100, 1
      %vm1117 = vcmp.eq.s32.totalorder %v1101, 1
      %vm1118 = vcmp.eq.s32.totalorder %v1102, 1
      %vm1119 = vcmp.eq.s32.totalorder %v1103, 1
      %vm1120 = vcmp.eq.s32.totalorder %v1104, 1
      %vm1121 = vcmp.eq.s32.totalorder %v1105, 1
      %vm1122 = vcmp.eq.s32.totalorder %v1106, 1
      %vm1123 = vcmp.eq.s32.totalorder %v1107, 1
      %v1124 = vsel %vm1108, %v1025, 0.0
      %v1125 = vsel %vm1109, %v1026, 0.0
      %v1126 = vsel %vm1110, %v1027, 0.0
      %v1127 = vsel %vm1111, %v1028, 0.0
      %v1128 = vsel %vm1112, %v1029, 0.0
      %v1129 = vsel %vm1113, %v1030, 0.0
      %v1130 = vsel %vm1114, %v1031, 0.0
      %v1131 = vsel %vm1115, %v1032, 0.0
      %v1132 = vsel %vm1116, %v1033, 0.0
      %v1133 = vsel %vm1117, %v1034, 0.0
      %v1134 = vsel %vm1118, %v1035, 0.0
      %v1135 = vsel %vm1119, %v1036, 0.0
      %v1136 = vsel %vm1120, %v1037, 0.0
      %v1137 = vsel %vm1121, %v1038, 0.0
      %v1138 = vsel %vm1122, %v1039, 0.0
      %v1139 = vsel %vm1123, %v1040, 0.0
      %1140 = vst [vmem:[%s267] sm:$0xff] %v1124
      %1141 = vst [vmem:[%s267 + $0x8] sm:$0xff] %v1125
      %1142 = vst [vmem:[%s267 + $0x10] sm:$0xff] %v1126
      %1143 = vst [vmem:[%s267 + $0x18] sm:$0xff] %v1127
      %1144 = vst [vmem:[%s267 + $0x20] sm:$0xff] %v1128
      %1145 = vst [vmem:[%s267 + $0x28] sm:$0xff] %v1129
      %1146 = vst [vmem:[%s267 + $0x30] sm:$0xff] %v1130
      %1147 = vst [vmem:[%s267 + $0x38] sm:$0xff] %v1131
      %1148 = vst [vmem:[%s267 + $0x40] sm:$0xff] %v1132
      %1149 = vst [vmem:[%s267 + $0x48] sm:$0xff] %v1133
      %1150 = vst [vmem:[%s267 + $0x50] sm:$0xff] %v1134
      %1151 = vst [vmem:[%s267 + $0x58] sm:$0xff] %v1135
      %1152 = vst [vmem:[%s267 + $0x60] sm:$0xff] %v1136
      %1153 = vst [vmem:[%s267 + $0x68] sm:$0xff] %v1137
      %1154 = vst [vmem:[%s267 + $0x70] sm:$0xff] %v1138
      %1155 = vst [vmem:[%s267 + $0x78] sm:$0xff] %v1139
      %v1156 = vadd.f32 %v1124, %v1125
      %v1157 = vadd.f32 %v1156, %v1126
      %v1158 = vadd.f32 %v1157, %v1127
      %v1159 = vadd.f32 %v1158, %v1128
      %v1160 = vadd.f32 %v1159, %v1129
      %v1161 = vadd.f32 %v1160, %v1130
      %v1162 = vadd.f32 %v1161, %v1131
      %v1163 = vadd.f32 %v1162, %v1132
      %v1164 = vadd.f32 %v1163, %v1133
      %v1165 = vadd.f32 %v1164, %v1134
      %v1166 = vadd.f32 %v1165, %v1135
      %v1167 = vadd.f32 %v1166, %v1136
      %v1168 = vadd.f32 %v1167, %v1137
      %v1169 = vadd.f32 %v1168, %v1138
      %v1170 = vadd.f32 %v1169, %v1139
      %v1171 = vrot.slane %v1170, 4
      %v1172 = vadd.f32 %v1170, %v1171
      %v1173 = vrot.slane %v1172, 2
      %v1174 = vadd.f32 %v1172, %v1173
      %v1175 = vrot.slane %v1174, 1
      %v1176 = vadd.f32 %v1174, %v1175
      %v1177 = vmul.f32 %v1124, %v1124
      %v1178 = vmul.f32 %v1125, %v1125
      %v1179 = vmul.f32 %v1126, %v1126
      %v1180 = vmul.f32 %v1127, %v1127
      %v1181 = vmul.f32 %v1128, %v1128
      %v1182 = vmul.f32 %v1129, %v1129
      %v1183 = vmul.f32 %v1130, %v1130
      %v1184 = vmul.f32 %v1131, %v1131
      %v1185 = vmul.f32 %v1132, %v1132
      %v1186 = vmul.f32 %v1133, %v1133
      %v1187 = vmul.f32 %v1134, %v1134
      %v1188 = vmul.f32 %v1135, %v1135
      %v1189 = vmul.f32 %v1136, %v1136
      %v1190 = vmul.f32 %v1137, %v1137
      %v1191 = vmul.f32 %v1138, %v1138
      %v1192 = vmul.f32 %v1139, %v1139
      %v1193 = vadd.f32 %v1177, %v1178
      %v1194 = vadd.f32 %v1193, %v1179
      %v1195 = vadd.f32 %v1194, %v1180
      %v1196 = vadd.f32 %v1195, %v1181
      %v1197 = vadd.f32 %v1196, %v1182
      %v1198 = vadd.f32 %v1197, %v1183
      %v1199 = vadd.f32 %v1198, %v1184
      %v1200 = vadd.f32 %v1199, %v1185
      %v1201 = vadd.f32 %v1200, %v1186
      %v1202 = vadd.f32 %v1201, %v1187
      %v1203 = vadd.f32 %v1202, %v1188
      %v1204 = vadd.f32 %v1203, %v1189
      %v1205 = vadd.f32 %v1204, %v1190
      %v1206 = vadd.f32 %v1205, %v1191
      %v1207 = vadd.f32 %v1206, %v1192
      %v1208 = vrot.slane %v1207, 4
      %v1209 = vadd.f32 %v1207, %v1208
      %v1210 = vrot.slane %v1209, 2
      %v1211 = vadd.f32 %v1209, %v1210
      %v1212 = vrot.slane %v1211, 1
      %v1213 = vadd.f32 %v1211, %v1212
      %1214 = vst [vmem:[%s271] sm:$0x1] %v1176
      %1215 = vst [vmem:[%s274] sm:$0x1] %v1213
      %s1216 = smul.u32 16, %s18
      %p1217 = scmp.lt.s32.totalorder %s1216, 47
      %s1218 = scalar_select %p1217, %s1216, 47
      %s1219 = smul.addr %s1218, 8
      %s1220 = scalar_lea.vmem %s4, %s1219
      %p1221 = scmp.lt.s32.totalorder %s18, 2
      %s1222 = scalar_select %p1221, %s18, 2
      %s1223 = scalar_lea.vmem %s5, %s1222
      %p1224 = scmp.lt.s32.totalorder %s18, 2
      %s1225 = scalar_select %p1224, %s18, 2
      %s1226 = scalar_lea.vmem %s6, %s1225
      // Predicated region
      $region37: #{gnn_block.2} parent=35 // pred_check
        %p1227 = pneg %p125
      $region38: #{gnn_block.2} parent=35 // pred_check_branch
        %1229 = sbr.rel (%p1227) target = $region40
      $region39: #{gnn_block.2} parent=35 // pred_region
        %s1230 = smul.u32 16, %s18
      $region40: #{gnn_block.2} parent=35 // pred_fallthru
        _
      // Predicated region
      $region41: #{gnn_block.2} parent=35 // pred_check
        %p1231 = pneg %p151
      $region42: #{gnn_block.2} parent=35 // pred_check_branch
        %1233 = sbr.rel (%p1231) target = $region44
      $region43: #{gnn_block.2} parent=35 // pred_region
        _
      $region44: #{gnn_block.2} parent=35 // pred_fallthru
        _
      // Predicated region
      $region45: #{gnn_block.2} parent=35 // pred_check
        %p1234 = pneg %p177
      $region46: #{gnn_block.2} parent=35 // pred_check_branch
        %1236 = sbr.rel (%p1234) target = $region48
      $region47: #{gnn_block.2} parent=35 // pred_region
        _
      $region48: #{gnn_block.2} parent=35 // pred_fallthru
        _
    $region36: #{gnn_block.2} parent=5 // pred_fallthru
      _
    %p1237 = scmp.le.s32.totalorder 2, %s13
    // Predicated region
    $region49: #{gnn_block.2} parent=5 // pred_check
      %p1238 = pneg %p1237
    $region50: #{gnn_block.2} parent=5 // pred_check_branch
      %1240 = sbr.rel (%p1238) target = $region52
    $region51: #{gnn_block.2} parent=5 // pred_region
      %s1241 = ssub.s32 %s13, 2
      // Predicated region
      $region53: #{gnn_block.2} parent=51 // pred_check
        %p1242 = pneg %p131
      $region54: #{gnn_block.2} parent=51 // pred_check_branch
        %1244 = sbr.rel (%p1242) target = $region56
      $region55: #{gnn_block.2} parent=51 // pred_region
        %s1245 = smul.u32 16, %s19
        %p1246 = scmp.lt.s32.totalorder %s1245, 47
        %s1247 = scalar_select %p1246, %s1245, 47
        %s1248 = smul.addr %s1247, 8
        %s1249 = scalar_lea.vmem %s4, %s1248
      $region56: #{gnn_block.2} parent=51 // pred_fallthru
        _
      // Predicated region
      $region57: #{gnn_block.2} parent=51 // pred_check
        %p1250 = pneg %p157
      $region58: #{gnn_block.2} parent=51 // pred_check_branch
        %1252 = sbr.rel (%p1250) target = $region60
      $region59: #{gnn_block.2} parent=51 // pred_region
        %p1253 = scmp.lt.s32.totalorder %s19, 2
        %s1254 = scalar_select %p1253, %s19, 2
        %s1255 = scalar_lea.vmem %s5, %s1254
      $region60: #{gnn_block.2} parent=51 // pred_fallthru
        _
      // Predicated region
      $region61: #{gnn_block.2} parent=51 // pred_check
        %p1256 = pneg %p183
      $region62: #{gnn_block.2} parent=51 // pred_check_branch
        %1258 = sbr.rel (%p1256) target = $region64
      $region63: #{gnn_block.2} parent=51 // pred_region
        %p1259 = scmp.lt.s32.totalorder %s19, 2
        %s1260 = scalar_select %p1259, %s19, 2
        %s1261 = scalar_lea.vmem %s6, %s1260
      $region64: #{gnn_block.2} parent=51 // pred_fallthru
        _
    $region52: #{gnn_block.2} parent=5 // pred_fallthru
      _
  $region6: #{gnn_block.2} parent=0 // loop_footer
    %s17 = sadd.s32 1, %s13
  $region7: #{gnn_block.2} parent=0 // loop_footer_branch
    %12 = sbr.rel target = $region3
  $region8: #{gnn_block.2} parent=0 // loop_exit
    _

</llo_original>
